<compile_context>
chip_gen: v6e
topology: v6e:2x2x1
jax: 0.10.0
libtpu: 0.0.40
codegen_flags: <defaults>
</compile_context>

<pallas_src>
import math

import jax
import jax.numpy as jnp
from jax import lax
from jax.experimental import pallas as pl
from jax.experimental.pallas import tpu as pltpu

INPUT_DIM = 128                         # Const.shape[0] (C_128.csv -> 128 points)
CHANNEL_DIM = 2
HIDDEN = 2 * INPUT_DIM
GS_TEMP = 5.0                           # only affects the (unused) soft sample
EPS = 1e-20
CHANNEL_RATE = math.log2(INPUT_DIM) / CHANNEL_DIM   # np.log2(input_dim)/channel_dim
INV_SQRT_2RATE = 1.0 / math.sqrt(2.0 * CHANNEL_RATE)
LN10_OVER_20 = math.log(10.0) / 20.0


def _lrelu(v):
    return jnp.where(v > 0, v, 0.1 * v)            # LeakyReLU(0.1)


def _softmax(v):
    m = jnp.max(v, axis=-1, keepdims=True)
    e = jnp.exp(v - m)
    denom = jnp.sum(e, axis=-1, keepdims=True)
    return e * pl.reciprocal(denom, approx=True)   # divide -> EUP slot


def gae_kernel(x_ref, u_ref, n_ref, ct_ref, c_ref, pc2_ref,
               w1_ref, b1_ref, w2_ref, b2_ref,
               w3_ref, b3_ref, w4_ref, b4_ref,
               w5_ref, b5_ref,
               ph_ref, d_ref, p_ref, cn_ref):
    x = x_ref[...]                                   # [TB, 1]  EbNo in dB

    # ---- encode: fc1 (1 -> 256) + LeakyReLU, fc2 (256 -> 128) ----
    h1 = _lrelu(x * w1_ref[...] + b1_ref[...])       # fan_in == 1 -> broadcast mul
    logits = jnp.dot(h1.astype(jnp.bfloat16), w2_ref[...],
                     preferred_element_type=jnp.float32) + b2_ref[...]

    # ---- gumbel_softmax(logits, GS_temp, hard=True): forward value is one-hot.
    # argmax(softmax((logits+g)/T)) == argmax(logits+g) -> skip the softmax.
    g = -jnp.log(-jnp.log(u_ref[...] + EPS) + EPS)   # Gumbel(0,1) samples
    z = logits + g                                   # [TB, 128]
    col = lax.broadcasted_iota(jnp.int32, z.shape, 1)
    z_max = jnp.max(z, axis=-1, keepdims=True)
    idx = jnp.min(jnp.where(z == z_max, col, z.shape[-1]), axis=-1, keepdims=True)
    p_h = (col == idx).astype(jnp.float32)           # one-hot at first argmax

    # ---- p = softmax(logits + eps) ----
    p = _softmax(logits + EPS)

    # ---- constellation power normalization ----
    # Cp1^2 = sum_j ||C_j||^2 * (p_j + eps);  pc2 = ||C_j||^2 precomputed.
    cp1_sq = jnp.sum(pc2_ref[...] * (p + EPS), axis=-1, keepdims=True)   # [TB, 1]
    inv_cp1 = lax.rsqrt(cp1_sq)                                          # [TB, 1]
    c_t = ct_ref[...]                                                    # [2, 128]
    cn = c_t[None, :, :] * inv_cp1[:, :, None]                           # [TB, 2, 128]

    # ---- transmitted symbol: T = (p_h @ C) * inv_cp1  (one tiny MXU dot) ----
    t = jnp.dot(p_h, c_ref[...], preferred_element_type=jnp.float32)     # [TB, 2]

    # ---- AWGN channel: noise / sqrt(2 * rate * snr), snr = 10^(x/10) ----
    inv_std = INV_SQRT_2RATE * jnp.exp(-x * LN10_OVER_20)                # [TB, 1]
    r = t * inv_cp1 + n_ref[...] * inv_std                               # [TB, 2]
    r0 = r[:, 0:1]
    r1 = r[:, 1:2]

    # ---- decode: fc3(cat([R, x]): 3 -> 256), fc4 (256 -> 256), fc5 (256 -> 128) ----
    w3 = w3_ref[...]                                                     # [3, 256]
    h2 = _lrelu(r0 * w3[0:1, :] + r1 * w3[1:2, :] + x * w3[2:3, :] + b3_ref[...])
    h3 = _lrelu(jnp.dot(h2.astype(jnp.bfloat16), w4_ref[...],
                        preferred_element_type=jnp.float32) + b4_ref[...])
    d = _softmax(jnp.dot(h3.astype(jnp.bfloat16), w5_ref[...],
                         preferred_element_type=jnp.float32) + b5_ref[...])

    ph_ref[...] = p_h
    d_ref[...] = d
    p_ref[...] = p
    cn_ref[...] = cn


def _choose_tb(B):
    # Fill the MXU M-dimension when the batch is large (256 rows on v6e/v7x);
    # for small batches use one 8-row-aligned tile.
    if B >= 256:
        return 256
    return max(8, ((B + 7) // 8) * 8)


def gae_forward(x, const, params, noise_key):
    w1, b1, w2, b2, w3, b3, w4, b4, w5, b5 = params
    B = x.shape[0]
    TB = _choose_tb(B)
    Bp = ((B + TB - 1) // TB) * TB                    # padded batch, multiple of TB

    ku, kn = jax.random.split(noise_key)
    u = jax.random.uniform(ku, (Bp, INPUT_DIM), jnp.float32)          # torch.rand
    n = jax.random.normal(kn, (Bp, CHANNEL_DIM), jnp.float32)         # torch.randn
    x2 = jnp.zeros((Bp, 1), jnp.float32).at[:B, 0].set(x.astype(jnp.float32))

    const_f = const.astype(jnp.float32)                               # [128, 2]
    c_t = const_f.T                                                   # [2, 128] lane-dense
    pc2 = jnp.sum(const_f * const_f, axis=1).reshape(1, INPUT_DIM)    # ||C_j||^2

    # MXU weights in bf16 (f32 accumulation in-kernel); small/broadcast layers f32.
    w2b = w2.astype(jnp.bfloat16)
    w4b = w4.astype(jnp.bfloat16)
    w5b = w5.astype(jnp.bfloat16)

    full = lambda a: pl.BlockSpec(a.shape, lambda i: (0,) * a.ndim)
    batched2 = lambda cols: pl.BlockSpec((TB, cols), lambda i: (i, 0))

    out_shape = (
        jax.ShapeDtypeStruct((Bp, INPUT_DIM), jnp.float32),               # p_h
        jax.ShapeDtypeStruct((Bp, INPUT_DIM), jnp.float32),               # D
        jax.ShapeDtypeStruct((Bp, INPUT_DIM), jnp.float32),               # p
        jax.ShapeDtypeStruct((Bp, CHANNEL_DIM, INPUT_DIM), jnp.float32),  # Cn (transposed)
    )
    in_specs = [
        batched2(1),            # x (dB)
        batched2(INPUT_DIM),    # gumbel uniforms
        batched2(CHANNEL_DIM),  # gaussian channel noise
        full(c_t),              # constellation [2, 128]
        full(const_f),          # constellation [128, 2] for the T dot
        full(pc2),              # per-point squared norms [1, 128]
        full(w1), full(b1), full(w2b), full(b2),
        full(w3), full(b3), full(w4b), full(b4),
        full(w5b), full(b5),
    ]
    out_specs = (
        batched2(INPUT_DIM),
        batched2(INPUT_DIM),
        batched2(INPUT_DIM),
        pl.BlockSpec((TB, CHANNEL_DIM, INPUT_DIM), lambda i: (i, 0, 0)),
    )

    p_h, d, p, cn_t = pl.pallas_call(
        gae_kernel,
        out_shape=out_shape,
        grid=(Bp // TB,),
        in_specs=in_specs,
        out_specs=out_specs,
        compiler_params=pltpu.CompilerParams(dimension_semantics=("parallel",)),
    )(x2, u, n, c_t, const_f, pc2, w1, b1, w2b, b2, w3, b3, w4b, b4, w5b, b5)

    # back to PyTorch [B, input_dim, channel_dim]; kernel output stays lane-dense.
    cn = jnp.transpose(cn_t[:B], (0, 2, 1))
    return p_h[:B], d[:B], p[:B], cn


def init_linear(key, fan_in, fan_out):
    """Deterministic PyTorch-style init; weight stored as [in, out] (pre-transposed)."""
    k = 1.0 / math.sqrt(fan_in)
    kw, kb = jax.random.split(key)
    w = jax.random.uniform(kw, (fan_in, fan_out), jnp.float32, minval=-k, maxval=k)
    b = jax.random.uniform(kb, (1, fan_out), jnp.float32, minval=-k, maxval=k)
    return w, b


if __name__ == "__main__":
    root = jax.random.PRNGKey(0)
    keys = jax.random.split(root, 8)
    B = 8

    # synthetic deterministic constellation (stands in for C_128.csv), shape [128, 2]
    const = jax.random.normal(keys[0], (INPUT_DIM, CHANNEL_DIM), jnp.float32)
    # one EbNo (dB) value per batch element
    x = jax.random.uniform(keys[1], (B,), jnp.float32, minval=0.0, maxval=10.0)

    params = (
        *init_linear(keys[2], 1, HIDDEN),                # fc1
        *init_linear(keys[3], HIDDEN, INPUT_DIM),        # fc2
        *init_linear(keys[4], CHANNEL_DIM + 1, HIDDEN),  # fc3
        *init_linear(keys[5], HIDDEN, HIDDEN),           # fc4
        *init_linear(keys[6], HIDDEN, INPUT_DIM),        # fc5
    )
    # fc6/fc7/fc8 are defined in __init__ but never used by forward() -> omitted.
    # p_s (soft gumbel sample) is computed in forward() but never returned -> omitted.

    p_h, D, p, Cn = jax.block_until_ready(gae_forward(x, const, params, keys[7]))

    assert p_h.shape == (B, INPUT_DIM) and D.shape == (B, INPUT_DIM)
    assert p.shape == (B, INPUT_DIM) and Cn.shape == (B, INPUT_DIM, CHANNEL_DIM)
    # each p_h row is one-hot, each D/p row sums to ~1
    assert bool(jnp.all(jnp.sum(p_h, axis=-1) == 1.0))
    assert bool(jnp.all(jnp.abs(jnp.sum(D, axis=-1) - 1.0) < 1e-2))
    print("KERNEL_OK")
</pallas_src>

<mosaic_0001>
module attributes {stable_mosaic.version = 11 : i64} {
  func.func @gae_kernel(%arg0: i32, %arg1: memref<8x1xf32, #tpu.memory_space<vmem>>, %arg2: memref<8x128xf32, #tpu.memory_space<vmem>>, %arg3: memref<8x2xf32, #tpu.memory_space<vmem>>, %arg4: memref<2x128xf32, #tpu.memory_space<vmem>>, %arg5: memref<128x2xf32, #tpu.memory_space<vmem>>, %arg6: memref<1x128xf32, #tpu.memory_space<vmem>>, %arg7: memref<1x256xf32, #tpu.memory_space<vmem>>, %arg8: memref<1x256xf32, #tpu.memory_space<vmem>>, %arg9: memref<256x128xbf16, #tpu.memory_space<vmem>>, %arg10: memref<1x128xf32, #tpu.memory_space<vmem>>, %arg11: memref<3x256xf32, #tpu.memory_space<vmem>>, %arg12: memref<1x256xf32, #tpu.memory_space<vmem>>, %arg13: memref<256x256xbf16, #tpu.memory_space<vmem>>, %arg14: memref<1x256xf32, #tpu.memory_space<vmem>>, %arg15: memref<256x128xbf16, #tpu.memory_space<vmem>>, %arg16: memref<1x128xf32, #tpu.memory_space<vmem>>, %arg17: memref<8x128xf32, #tpu.memory_space<vmem>>, %arg18: memref<8x128xf32, #tpu.memory_space<vmem>>, %arg19: memref<8x128xf32, #tpu.memory_space<vmem>>, %arg20: memref<8x2x128xf32, #tpu.memory_space<vmem>>) attributes {dimension_semantics = [#tpu.dimension_semantics<parallel>], iteration_bounds = array<i64: 1>, scalar_prefetch = 0 : i64, scratch_operands = 0 : i64, tpu.core_type = #tpu.core_type<tc>, window_params = [{transform_indices = @transform_0, window_bounds = array<i64: 8, 1>}, {transform_indices = @transform_1, window_bounds = array<i64: 8, 128>}, {transform_indices = @transform_2, window_bounds = array<i64: 8, 2>}, {pipeline_mode = #tpu.pipeline_mode<synchronous>, transform_indices = @transform_3, window_bounds = array<i64: 2, 128>}, {pipeline_mode = #tpu.pipeline_mode<synchronous>, transform_indices = @transform_4, window_bounds = array<i64: 128, 2>}, {pipeline_mode = #tpu.pipeline_mode<synchronous>, transform_indices = @transform_5, window_bounds = array<i64: 1, 128>}, {pipeline_mode = #tpu.pipeline_mode<synchronous>, transform_indices = @transform_6, window_bounds = array<i64: 1, 256>}, {pipeline_mode = #tpu.pipeline_mode<synchronous>, transform_indices = @transform_7, window_bounds = array<i64: 1, 256>}, {pipeline_mode = #tpu.pipeline_mode<synchronous>, transform_indices = @transform_8, window_bounds = array<i64: 256, 128>}, {pipeline_mode = #tpu.pipeline_mode<synchronous>, transform_indices = @transform_9, window_bounds = array<i64: 1, 128>}, {pipeline_mode = #tpu.pipeline_mode<synchronous>, transform_indices = @transform_10, window_bounds = array<i64: 3, 256>}, {pipeline_mode = #tpu.pipeline_mode<synchronous>, transform_indices = @transform_11, window_bounds = array<i64: 1, 256>}, {pipeline_mode = #tpu.pipeline_mode<synchronous>, transform_indices = @transform_12, window_bounds = array<i64: 256, 256>}, {pipeline_mode = #tpu.pipeline_mode<synchronous>, transform_indices = @transform_13, window_bounds = array<i64: 1, 256>}, {pipeline_mode = #tpu.pipeline_mode<synchronous>, transform_indices = @transform_14, window_bounds = array<i64: 256, 128>}, {pipeline_mode = #tpu.pipeline_mode<synchronous>, transform_indices = @transform_15, window_bounds = array<i64: 1, 128>}, {transform_indices = @transform_16, window_bounds = array<i64: 8, 128>}, {transform_indices = @transform_17, window_bounds = array<i64: 8, 128>}, {transform_indices = @transform_18, window_bounds = array<i64: 8, 128>}, {transform_indices = @transform_19, window_bounds = array<i64: 8, 2, 128>}]} {
    %c0 = arith.constant 0 : index
    %c0_0 = arith.constant 0 : index
    %0 = vector.load %arg1[%c0, %c0_0] : memref<8x1xf32, #tpu.memory_space<vmem>>, vector<8x1xf32>
    %c0_1 = arith.constant 0 : index
    %c0_2 = arith.constant 0 : index
    %1 = vector.load %arg7[%c0_1, %c0_2] : memref<1x256xf32, #tpu.memory_space<vmem>>, vector<1x256xf32>
    %2 = vector.broadcast %0 : vector<8x1xf32> to vector<8x256xf32>
    %3 = vector.broadcast %1 : vector<1x256xf32> to vector<8x256xf32>
    %4 = arith.mulf %2, %3 : vector<8x256xf32>
    %c0_3 = arith.constant 0 : index
    %c0_4 = arith.constant 0 : index
    %5 = vector.load %arg8[%c0_3, %c0_4] : memref<1x256xf32, #tpu.memory_space<vmem>>, vector<1x256xf32>
    %6 = vector.broadcast %5 : vector<1x256xf32> to vector<8x256xf32>
    %7 = arith.addf %4, %6 : vector<8x256xf32>
    %cst = arith.constant 0.000000e+00 : f32
    %8 = vector.broadcast %cst : f32 to vector<8x256xf32>
    %9 = arith.cmpf ogt, %7, %8 : vector<8x256xf32>
    %cst_5 = arith.constant 1.000000e-01 : f32
    %10 = vector.broadcast %cst_5 : f32 to vector<8x256xf32>
    %11 = arith.mulf %10, %7 : vector<8x256xf32>
    %12 = arith.select %9, %7, %11 : vector<8x256xi1>, vector<8x256xf32>
    %13 = arith.truncf %12 : vector<8x256xf32> to vector<8x256xbf16>
    %c0_6 = arith.constant 0 : index
    %c0_7 = arith.constant 0 : index
    %14 = vector.load %arg9[%c0_6, %c0_7] : memref<256x128xbf16, #tpu.memory_space<vmem>>, vector<256x128xbf16>
    %cst_8 = arith.constant dense<0.000000e+00> : vector<8x128xf32>
    %15 = tpu.matmul %13, %14, %cst_8 {dimension_numbers = #tpu.dot_dimension_numbers<[1], [0], [0], [1], [0, 0, 1, 1], [], []>} : vector<8x256xbf16>, vector<256x128xbf16>, vector<8x128xf32> -> vector<8x128xf32>
    %c0_9 = arith.constant 0 : index
    %c0_10 = arith.constant 0 : index
    %16 = vector.load %arg10[%c0_9, %c0_10] : memref<1x128xf32, #tpu.memory_space<vmem>>, vector<1x128xf32>
    %17 = vector.broadcast %16 : vector<1x128xf32> to vector<8x128xf32>
    %18 = arith.addf %15, %17 : vector<8x128xf32>
    %c0_11 = arith.constant 0 : index
    %c0_12 = arith.constant 0 : index
    %19 = vector.load %arg2[%c0_11, %c0_12] : memref<8x128xf32, #tpu.memory_space<vmem>>, vector<8x128xf32>
    %cst_13 = arith.constant 9.99999968E-21 : f32
    %20 = vector.broadcast %cst_13 : f32 to vector<8x128xf32>
    %21 = arith.addf %19, %20 : vector<8x128xf32>
    %22 = math.log %21 : vector<8x128xf32>
    %cst_14 = arith.constant 0.000000e+00 : f32
    %23 = vector.broadcast %cst_14 : f32 to vector<8x128xf32>
    %24 = arith.subf %23, %22 : vector<8x128xf32>
    %cst_15 = arith.constant 9.99999968E-21 : f32
    %25 = vector.broadcast %cst_15 : f32 to vector<8x128xf32>
    %26 = arith.addf %24, %25 : vector<8x128xf32>
    %27 = math.log %26 : vector<8x128xf32>
    %cst_16 = arith.constant 0.000000e+00 : f32
    %28 = vector.broadcast %cst_16 : f32 to vector<8x128xf32>
    %29 = arith.subf %28, %27 : vector<8x128xf32>
    %30 = arith.addf %18, %29 : vector<8x128xf32>
    %31 = tpu.iota {dimensions = array<i32: 1>} : vector<8x128xi32>
    %cst_17 = arith.constant dense<0xFF800000> : vector<8xf32>
    %32 = vector.multi_reduction <maximumf>, %30, %cst_17 [1] : vector<8x128xf32> to vector<8xf32>
    %33 = vector.shape_cast %32 : vector<8xf32> to vector<8x1xf32>
    %34 = vector.broadcast %33 : vector<8x1xf32> to vector<8x128xf32>
    %35 = arith.cmpf oeq, %30, %34 : vector<8x128xf32>
    %c128_i32 = arith.constant 128 : i32
    %36 = vector.broadcast %c128_i32 : i32 to vector<8x128xi32>
    %37 = arith.select %35, %31, %36 : vector<8x128xi1>, vector<8x128xi32>
    %cst_18 = arith.constant dense<2147483647> : vector<8xi32>
    %38 = vector.multi_reduction <minsi>, %37, %cst_18 [1] : vector<8x128xi32> to vector<8xi32>
    %39 = vector.shape_cast %38 : vector<8xi32> to vector<8x1xi32>
    %40 = vector.broadcast %39 : vector<8x1xi32> to vector<8x128xi32>
    %41 = arith.cmpi eq, %31, %40 : vector<8x128xi32>
    %42 = arith.extui %41 : vector<8x128xi1> to vector<8x128xi32>
    %43 = arith.sitofp %42 : vector<8x128xi32> to vector<8x128xf32>
    %cst_19 = arith.constant 9.99999968E-21 : f32
    %44 = vector.broadcast %cst_19 : f32 to vector<8x128xf32>
    %45 = arith.addf %18, %44 : vector<8x128xf32>
    %cst_20 = arith.constant dense<0xFF800000> : vector<8xf32>
    %46 = vector.multi_reduction <maximumf>, %45, %cst_20 [1] : vector<8x128xf32> to vector<8xf32>
    %47 = vector.shape_cast %46 : vector<8xf32> to vector<8x1xf32>
    %48 = vector.broadcast %47 : vector<8x1xf32> to vector<8x128xf32>
    %49 = arith.subf %45, %48 : vector<8x128xf32>
    %50 = math.exp %49 : vector<8x128xf32>
    %cst_21 = arith.constant dense<0.000000e+00> : vector<8xf32>
    %51 = vector.multi_reduction <add>, %50, %cst_21 [1] : vector<8x128xf32> to vector<8xf32>
    %52 = vector.shape_cast %51 : vector<8xf32> to vector<8x1xf32>
    %53 = tpu.reciprocal %52 {approx = true} : vector<8x1xf32> -> vector<8x1xf32>
    %54 = vector.broadcast %53 : vector<8x1xf32> to vector<8x128xf32>
    %55 = arith.mulf %50, %54 : vector<8x128xf32>
    %c0_22 = arith.constant 0 : index
    %c0_23 = arith.constant 0 : index
    %56 = vector.load %arg6[%c0_22, %c0_23] : memref<1x128xf32, #tpu.memory_space<vmem>>, vector<1x128xf32>
    %cst_24 = arith.constant 9.99999968E-21 : f32
    %57 = vector.broadcast %cst_24 : f32 to vector<8x128xf32>
    %58 = arith.addf %55, %57 : vector<8x128xf32>
    %59 = vector.broadcast %56 : vector<1x128xf32> to vector<8x128xf32>
    %60 = arith.mulf %59, %58 : vector<8x128xf32>
    %cst_25 = arith.constant dense<0.000000e+00> : vector<8xf32>
    %61 = vector.multi_reduction <add>, %60, %cst_25 [1] : vector<8x128xf32> to vector<8xf32>
    %62 = vector.shape_cast %61 : vector<8xf32> to vector<8x1xf32>
    %63 = math.rsqrt %62 : vector<8x1xf32>
    %c0_26 = arith.constant 0 : index
    %c0_27 = arith.constant 0 : index
    %64 = vector.load %arg4[%c0_26, %c0_27] : memref<2x128xf32, #tpu.memory_space<vmem>>, vector<2x128xf32>
    %65 = vector.shape_cast %64 : vector<2x128xf32> to vector<1x2x128xf32>
    %66 = vector.shape_cast %63 : vector<8x1xf32> to vector<8x1x1xf32>
    %67 = vector.broadcast %65 : vector<1x2x128xf32> to vector<8x2x128xf32>
    %68 = vector.broadcast %66 : vector<8x1x1xf32> to vector<8x2x128xf32>
    %69 = arith.mulf %67, %68 : vector<8x2x128xf32>
    %c0_28 = arith.constant 0 : index
    %c0_29 = arith.constant 0 : index
    %70 = vector.load %arg5[%c0_28, %c0_29] : memref<128x2xf32, #tpu.memory_space<vmem>>, vector<128x2xf32>
    %cst_30 = arith.constant dense<0.000000e+00> : vector<8x2xf32>
    %71 = tpu.matmul %43, %70, %cst_30 {dimension_numbers = #tpu.dot_dimension_numbers<[1], [0], [0], [1], [0, 0, 1, 1], [], []>} : vector<8x128xf32>, vector<128x2xf32>, vector<8x2xf32> -> vector<8x2xf32>
    %cst_31 = arith.constant 0.000000e+00 : f32
    %72 = vector.broadcast %cst_31 : f32 to vector<8x1xf32>
    %73 = arith.subf %72, %0 : vector<8x1xf32>
    %cst_32 = arith.constant 0.115129255 : f32
    %74 = vector.broadcast %cst_32 : f32 to vector<8x1xf32>
    %75 = arith.mulf %73, %74 : vector<8x1xf32>
    %76 = math.exp %75 : vector<8x1xf32>
    %cst_33 = arith.constant 0.377964467 : f32
    %77 = vector.broadcast %cst_33 : f32 to vector<8x1xf32>
    %78 = arith.mulf %77, %76 : vector<8x1xf32>
    %79 = vector.broadcast %63 : vector<8x1xf32> to vector<8x2xf32>
    %80 = arith.mulf %71, %79 : vector<8x2xf32>
    %c0_34 = arith.constant 0 : index
    %c0_35 = arith.constant 0 : index
    %81 = vector.load %arg3[%c0_34, %c0_35] : memref<8x2xf32, #tpu.memory_space<vmem>>, vector<8x2xf32>
    %82 = vector.broadcast %78 : vector<8x1xf32> to vector<8x2xf32>
    %83 = arith.mulf %81, %82 : vector<8x2xf32>
    %84 = arith.addf %80, %83 : vector<8x2xf32>
    %85 = vector.extract_strided_slice %84 {offsets = [0, 0], sizes = [8, 1], strides = [1, 1]} : vector<8x2xf32> to vector<8x1xf32>
    %86 = vector.extract_strided_slice %84 {offsets = [0, 1], sizes = [8, 1], strides = [1, 1]} : vector<8x2xf32> to vector<8x1xf32>
    %c0_36 = arith.constant 0 : index
    %c0_37 = arith.constant 0 : index
    %87 = vector.load %arg11[%c0_36, %c0_37] : memref<3x256xf32, #tpu.memory_space<vmem>>, vector<3x256xf32>
    %88 = vector.extract_strided_slice %87 {offsets = [0, 0], sizes = [1, 256], strides = [1, 1]} : vector<3x256xf32> to vector<1x256xf32>
    %89 = vector.broadcast %85 : vector<8x1xf32> to vector<8x256xf32>
    %90 = vector.broadcast %88 : vector<1x256xf32> to vector<8x256xf32>
    %91 = arith.mulf %89, %90 : vector<8x256xf32>
    %92 = vector.extract_strided_slice %87 {offsets = [1, 0], sizes = [1, 256], strides = [1, 1]} : vector<3x256xf32> to vector<1x256xf32>
    %93 = vector.broadcast %86 : vector<8x1xf32> to vector<8x256xf32>
    %94 = vector.broadcast %92 : vector<1x256xf32> to vector<8x256xf32>
    %95 = arith.mulf %93, %94 : vector<8x256xf32>
    %96 = arith.addf %91, %95 : vector<8x256xf32>
    %97 = vector.extract_strided_slice %87 {offsets = [2, 0], sizes = [1, 256], strides = [1, 1]} : vector<3x256xf32> to vector<1x256xf32>
    %98 = vector.broadcast %0 : vector<8x1xf32> to vector<8x256xf32>
    %99 = vector.broadcast %97 : vector<1x256xf32> to vector<8x256xf32>
    %100 = arith.mulf %98, %99 : vector<8x256xf32>
    %101 = arith.addf %96, %100 : vector<8x256xf32>
    %c0_38 = arith.constant 0 : index
    %c0_39 = arith.constant 0 : index
    %102 = vector.load %arg12[%c0_38, %c0_39] : memref<1x256xf32, #tpu.memory_space<vmem>>, vector<1x256xf32>
    %103 = vector.broadcast %102 : vector<1x256xf32> to vector<8x256xf32>
    %104 = arith.addf %101, %103 : vector<8x256xf32>
    %cst_40 = arith.constant 0.000000e+00 : f32
    %105 = vector.broadcast %cst_40 : f32 to vector<8x256xf32>
    %106 = arith.cmpf ogt, %104, %105 : vector<8x256xf32>
    %cst_41 = arith.constant 1.000000e-01 : f32
    %107 = vector.broadcast %cst_41 : f32 to vector<8x256xf32>
    %108 = arith.mulf %107, %104 : vector<8x256xf32>
    %109 = arith.select %106, %104, %108 : vector<8x256xi1>, vector<8x256xf32>
    %110 = arith.truncf %109 : vector<8x256xf32> to vector<8x256xbf16>
    %c0_42 = arith.constant 0 : index
    %c0_43 = arith.constant 0 : index
    %111 = vector.load %arg13[%c0_42, %c0_43] : memref<256x256xbf16, #tpu.memory_space<vmem>>, vector<256x256xbf16>
    %cst_44 = arith.constant dense<0.000000e+00> : vector<8x256xf32>
    %112 = tpu.matmul %110, %111, %cst_44 {dimension_numbers = #tpu.dot_dimension_numbers<[1], [0], [0], [1], [0, 0, 1, 1], [], []>} : vector<8x256xbf16>, vector<256x256xbf16>, vector<8x256xf32> -> vector<8x256xf32>
    %c0_45 = arith.constant 0 : index
    %c0_46 = arith.constant 0 : index
    %113 = vector.load %arg14[%c0_45, %c0_46] : memref<1x256xf32, #tpu.memory_space<vmem>>, vector<1x256xf32>
    %114 = vector.broadcast %113 : vector<1x256xf32> to vector<8x256xf32>
    %115 = arith.addf %112, %114 : vector<8x256xf32>
    %cst_47 = arith.constant 0.000000e+00 : f32
    %116 = vector.broadcast %cst_47 : f32 to vector<8x256xf32>
    %117 = arith.cmpf ogt, %115, %116 : vector<8x256xf32>
    %cst_48 = arith.constant 1.000000e-01 : f32
    %118 = vector.broadcast %cst_48 : f32 to vector<8x256xf32>
    %119 = arith.mulf %118, %115 : vector<8x256xf32>
    %120 = arith.select %117, %115, %119 : vector<8x256xi1>, vector<8x256xf32>
    %121 = arith.truncf %120 : vector<8x256xf32> to vector<8x256xbf16>
    %c0_49 = arith.constant 0 : index
    %c0_50 = arith.constant 0 : index
    %122 = vector.load %arg15[%c0_49, %c0_50] : memref<256x128xbf16, #tpu.memory_space<vmem>>, vector<256x128xbf16>
    %cst_51 = arith.constant dense<0.000000e+00> : vector<8x128xf32>
    %123 = tpu.matmul %121, %122, %cst_51 {dimension_numbers = #tpu.dot_dimension_numbers<[1], [0], [0], [1], [0, 0, 1, 1], [], []>} : vector<8x256xbf16>, vector<256x128xbf16>, vector<8x128xf32> -> vector<8x128xf32>
    %c0_52 = arith.constant 0 : index
    %c0_53 = arith.constant 0 : index
    %124 = vector.load %arg16[%c0_52, %c0_53] : memref<1x128xf32, #tpu.memory_space<vmem>>, vector<1x128xf32>
    %125 = vector.broadcast %124 : vector<1x128xf32> to vector<8x128xf32>
    %126 = arith.addf %123, %125 : vector<8x128xf32>
    %cst_54 = arith.constant dense<0xFF800000> : vector<8xf32>
    %127 = vector.multi_reduction <maximumf>, %126, %cst_54 [1] : vector<8x128xf32> to vector<8xf32>
    %128 = vector.shape_cast %127 : vector<8xf32> to vector<8x1xf32>
    %129 = vector.broadcast %128 : vector<8x1xf32> to vector<8x128xf32>
    %130 = arith.subf %126, %129 : vector<8x128xf32>
    %131 = math.exp %130 : vector<8x128xf32>
    %cst_55 = arith.constant dense<0.000000e+00> : vector<8xf32>
    %132 = vector.multi_reduction <add>, %131, %cst_55 [1] : vector<8x128xf32> to vector<8xf32>
    %133 = vector.shape_cast %132 : vector<8xf32> to vector<8x1xf32>
    %134 = tpu.reciprocal %133 {approx = true} : vector<8x1xf32> -> vector<8x1xf32>
    %135 = vector.broadcast %134 : vector<8x1xf32> to vector<8x128xf32>
    %136 = arith.mulf %131, %135 : vector<8x128xf32>
    %c0_56 = arith.constant 0 : index
    %c0_57 = arith.constant 0 : index
    %137 = vector.load %arg17[%c0_56, %c0_57] : memref<8x128xf32, #tpu.memory_space<vmem>>, vector<8x128xf32>
    tpu.vector_store %arg17[%c0_56, %c0_57], %43 {strides = array<i32>} : memref<8x128xf32, #tpu.memory_space<vmem>>, vector<8x128xf32>,
    %c0_58 = arith.constant 0 : index
    %c0_59 = arith.constant 0 : index
    %138 = vector.load %arg18[%c0_58, %c0_59] : memref<8x128xf32, #tpu.memory_space<vmem>>, vector<8x128xf32>
    tpu.vector_store %arg18[%c0_58, %c0_59], %136 {strides = array<i32>} : memref<8x128xf32, #tpu.memory_space<vmem>>, vector<8x128xf32>,
    %c0_60 = arith.constant 0 : index
    %c0_61 = arith.constant 0 : index
    %139 = vector.load %arg19[%c0_60, %c0_61] : memref<8x128xf32, #tpu.memory_space<vmem>>, vector<8x128xf32>
    tpu.vector_store %arg19[%c0_60, %c0_61], %55 {strides = array<i32>} : memref<8x128xf32, #tpu.memory_space<vmem>>, vector<8x128xf32>,
    %c0_62 = arith.constant 0 : index
    %c0_63 = arith.constant 0 : index
    %c0_64 = arith.constant 0 : index
    %140 = vector.load %arg20[%c0_62, %c0_63, %c0_64] : memref<8x2x128xf32, #tpu.memory_space<vmem>>, vector<8x2x128xf32>
    tpu.vector_store %arg20[%c0_62, %c0_63, %c0_64], %69 {strides = array<i32>} : memref<8x2x128xf32, #tpu.memory_space<vmem>>, vector<8x2x128xf32>,
    return
  }
  func.func @transform_0(%arg0: i32) -> (i32, i32) {
    %c0_i32 = arith.constant 0 : i32
    %c0_i32_0 = arith.constant 0 : i32
    return %arg0, %c0_i32 : i32, i32
  }
  func.func @transform_1(%arg0: i32) -> (i32, i32) {
    %c0_i32 = arith.constant 0 : i32
    %c0_i32_0 = arith.constant 0 : i32
    return %arg0, %c0_i32 : i32, i32
  }
  func.func @transform_2(%arg0: i32) -> (i32, i32) {
    %c0_i32 = arith.constant 0 : i32
    %c0_i32_0 = arith.constant 0 : i32
    return %arg0, %c0_i32 : i32, i32
  }
  func.func @transform_3(%arg0: i32) -> (i32, i32) {
    %c0_i32 = arith.constant 0 : i32
    %c0_i32_0 = arith.constant 0 : i32
    %c0_i32_1 = arith.constant 0 : i32
    return %c0_i32, %c0_i32_0 : i32, i32
  }
  func.func @transform_4(%arg0: i32) -> (i32, i32) {
    %c0_i32 = arith.constant 0 : i32
    %c0_i32_0 = arith.constant 0 : i32
    %c0_i32_1 = arith.constant 0 : i32
    return %c0_i32, %c0_i32_0 : i32, i32
  }
  func.func @transform_5(%arg0: i32) -> (i32, i32) {
    %c0_i32 = arith.constant 0 : i32
    %c0_i32_0 = arith.constant 0 : i32
    %c0_i32_1 = arith.constant 0 : i32
    return %c0_i32, %c0_i32_0 : i32, i32
  }
  func.func @transform_6(%arg0: i32) -> (i32, i32) {
    %c0_i32 = arith.constant 0 : i32
    %c0_i32_0 = arith.constant 0 : i32
    %c0_i32_1 = arith.constant 0 : i32
    return %c0_i32, %c0_i32_0 : i32, i32
  }
  func.func @transform_7(%arg0: i32) -> (i32, i32) {
    %c0_i32 = arith.constant 0 : i32
    %c0_i32_0 = arith.constant 0 : i32
    %c0_i32_1 = arith.constant 0 : i32
    return %c0_i32, %c0_i32_0 : i32, i32
  }
  func.func @transform_8(%arg0: i32) -> (i32, i32) {
    %c0_i32 = arith.constant 0 : i32
    %c0_i32_0 = arith.constant 0 : i32
    %c0_i32_1 = arith.constant 0 : i32
    return %c0_i32, %c0_i32_0 : i32, i32
  }
  func.func @transform_9(%arg0: i32) -> (i32, i32) {
    %c0_i32 = arith.constant 0 : i32
    %c0_i32_0 = arith.constant 0 : i32
    %c0_i32_1 = arith.constant 0 : i32
    return %c0_i32, %c0_i32_0 : i32, i32
  }
  func.func @transform_10(%arg0: i32) -> (i32, i32) {
    %c0_i32 = arith.constant 0 : i32
    %c0_i32_0 = arith.constant 0 : i32
    %c0_i32_1 = arith.constant 0 : i32
    return %c0_i32, %c0_i32_0 : i32, i32
  }
  func.func @transform_11(%arg0: i32) -> (i32, i32) {
    %c0_i32 = arith.constant 0 : i32
    %c0_i32_0 = arith.constant 0 : i32
    %c0_i32_1 = arith.constant 0 : i32
    return %c0_i32, %c0_i32_0 : i32, i32
  }
  func.func @transform_12(%arg0: i32) -> (i32, i32) {
    %c0_i32 = arith.constant 0 : i32
    %c0_i32_0 = arith.constant 0 : i32
    %c0_i32_1 = arith.constant 0 : i32
    return %c0_i32, %c0_i32_0 : i32, i32
  }
  func.func @transform_13(%arg0: i32) -> (i32, i32) {
    %c0_i32 = arith.constant 0 : i32
    %c0_i32_0 = arith.constant 0 : i32
    %c0_i32_1 = arith.constant 0 : i32
    return %c0_i32, %c0_i32_0 : i32, i32
  }
  func.func @transform_14(%arg0: i32) -> (i32, i32) {
    %c0_i32 = arith.constant 0 : i32
    %c0_i32_0 = arith.constant 0 : i32
    %c0_i32_1 = arith.constant 0 : i32
    return %c0_i32, %c0_i32_0 : i32, i32
  }
  func.func @transform_15(%arg0: i32) -> (i32, i32) {
    %c0_i32 = arith.constant 0 : i32
    %c0_i32_0 = arith.constant 0 : i32
    %c0_i32_1 = arith.constant 0 : i32
    return %c0_i32, %c0_i32_0 : i32, i32
  }
  func.func @transform_16(%arg0: i32) -> (i32, i32) {
    %c0_i32 = arith.constant 0 : i32
    %c0_i32_0 = arith.constant 0 : i32
    return %arg0, %c0_i32 : i32, i32
  }
  func.func @transform_17(%arg0: i32) -> (i32, i32) {
    %c0_i32 = arith.constant 0 : i32
    %c0_i32_0 = arith.constant 0 : i32
    return %arg0, %c0_i32 : i32, i32
  }
  func.func @transform_18(%arg0: i32) -> (i32, i32) {
    %c0_i32 = arith.constant 0 : i32
    %c0_i32_0 = arith.constant 0 : i32
    return %arg0, %c0_i32 : i32, i32
  }
  func.func @transform_19(%arg0: i32) -> (i32, i32, i32) {
    %c0_i32 = arith.constant 0 : i32
    %c0_i32_0 = arith.constant 0 : i32
    %c0_i32_1 = arith.constant 0 : i32
    return %arg0, %c0_i32, %c0_i32_0 : i32, i32, i32
  }
}

</mosaic_0001>

<llo_original>
// kernel: tpu_custom_call.1
$region0: #{tpu_custom_call.1}
  #allocation0 [shape = 'u32[]', space=smem, size = 0x4, offset = 0x4, fixed_abs, tag = 'smem constant byte address 0x4 - core index']
  #allocation1 [shape = 'u32[144,128]{1,0:T(1,128)}', space=vmem, size = 0x12000, scoped, tag = 'internal scratch']
  %s0 = inlined_call_operand.vmem [shape: f32[8,1], index: 0, kind: input, shape index: {}]
  %s1 = inlined_call_operand.vmem [shape: f32[8,128], index: 1, kind: input, shape index: {}]
  %s2 = inlined_call_operand.vmem [shape: f32[8,2], index: 2, kind: input, shape index: {}]
  %s3 = inlined_call_operand.vmem [shape: f32[2,128], index: 3, kind: input, shape index: {}]
  %s4 = inlined_call_operand.vmem [shape: f32[128,2], index: 4, kind: input, shape index: {}]
  %s5 = inlined_call_operand.vmem [shape: f32[1,128], index: 5, kind: input, shape index: {}]
  %s6 = inlined_call_operand.vmem [shape: f32[1,256], index: 6, kind: input, shape index: {}]
  %s7 = inlined_call_operand.vmem [shape: f32[1,256], index: 7, kind: input, shape index: {}]
  %s8 = inlined_call_operand.vmem [shape: bf16[256,128], index: 8, kind: input, shape index: {}]
  %s9 = inlined_call_operand.vmem [shape: f32[1,128], index: 9, kind: input, shape index: {}]
  %s10 = inlined_call_operand.vmem [shape: f32[3,256], index: 10, kind: input, shape index: {}]
  %s11 = inlined_call_operand.vmem [shape: f32[1,256], index: 11, kind: input, shape index: {}]
  %s12 = inlined_call_operand.hbm [shape: bf16[256,256], index: 12, kind: input, shape index: {}]
  %s13 = inlined_call_operand.vmem [shape: f32[1,256], index: 13, kind: input, shape index: {}]
  %s14 = inlined_call_operand.hbm [shape: bf16[256,128], index: 14, kind: input, shape index: {}]
  %s15 = inlined_call_operand.vmem [shape: f32[1,128], index: 15, kind: input, shape index: {}]
  %s16 = inlined_call_operand.hbm [shape: f32[8,128], index: 16, kind: output, shape index: {0}]
  %s17 = inlined_call_operand.hbm [shape: f32[8,128], index: 17, kind: output, shape index: {1}]
  %s18 = inlined_call_operand.hbm [shape: f32[8,128], index: 18, kind: output, shape index: {2}]
  %s19 = inlined_call_operand.hbm [shape: f32[8,2,128], index: 19, kind: output, shape index: {3}]
  %20 = xla_tuple %s16, %s17, %s18, %s19
  %s21 = sld [smem:[#allocation0]]
  $region106: #{tpu_custom_call.1} parent=0
    _
  %s23 = ssub.s32 1, %s21
  %s24 = scalar_select 0, %s23, %s21
  $region1: #{tpu_custom_call.1} parent=0
    #allocation2 [shape = 'u8[131072]{0}', space=vmem, size = 0x20000, scoped, tag = 'input window, operand 12, single buffered']
    #allocation3 [shape = 's32[1]{0}', space=sflag, size = 0x4, scoped, tag = 'scoped memory for tpu_custom_call.1']
    #allocation4 [shape = 's32[1]{0}', space=sflag, size = 0x4, scoped, tag = 'scoped memory for tpu_custom_call.1']
    #allocation5 [shape = 'u8[65536]{0}', space=vmem, size = 0x10000, scoped, tag = 'input window, operand 14, single buffered']
    #allocation6 [shape = 's32[1]{0}', space=sflag, size = 0x4, scoped, tag = 'scoped memory for tpu_custom_call.1']
    #allocation7 [shape = 'u8[4096]{0}', space=vmem, size = 0x1000, scoped, tag = 'output window, operand 0, single buffered']
    #allocation8 [shape = 'u8[4096]{0}', space=vmem, size = 0x1000, scoped, tag = 'output window, operand 1, single buffered']
    #allocation9 [shape = 's32[1]{0}', space=sflag, size = 0x4, scoped, tag = 'scoped memory for tpu_custom_call.1']
    #allocation10 [shape = 'u8[4096]{0}', space=vmem, size = 0x1000, scoped, tag = 'output window, operand 2, single buffered']
    #allocation11 [shape = 'u8[8192]{0}', space=vmem, size = 0x2000, scoped, tag = 'output window, operand 3, single buffered']
    #allocation12 [shape = 's32[1]{0}', space=sflag, size = 0x4, scoped, tag = 'scoped memory for tpu_custom_call.1']
    %25 = vsyncpa [#allocation3], 0
    %26 = vsyncpa [#allocation6], 0
    %27 = vsyncpa [#allocation4], 0
    %28 = vsyncpa [#allocation9], 0
    %29 = vsyncpa [#allocation12], 0
    // Predicated region
    $region2: #{tpu_custom_call.1} parent=1 // pred_check
      _
    $region3: #{tpu_custom_call.1} parent=1 // pred_check_branch
      %31 = sbr.rel (0) target = $region5
    $region4: #{tpu_custom_call.1} parent=1 // pred_region
      _
    $region5: #{tpu_custom_call.1} parent=1 // pred_fallthru
      _
    // Predicated region
    $region6: #{tpu_custom_call.1} parent=1 // pred_check
      _
    $region7: #{tpu_custom_call.1} parent=1 // pred_check_branch
      %33 = sbr.rel (0) target = $region9
    $region8: #{tpu_custom_call.1} parent=1 // pred_region
      _
    $region9: #{tpu_custom_call.1} parent=1 // pred_fallthru
      _
    // Predicated region
    $region10: #{tpu_custom_call.1} parent=1 // pred_check
      _
    $region11: #{tpu_custom_call.1} parent=1 // pred_check_branch
      %35 = sbr.rel (0) target = $region13
    $region12: #{tpu_custom_call.1} parent=1 // pred_region
      _
    $region13: #{tpu_custom_call.1} parent=1 // pred_fallthru
      _
    // Predicated region
    $region14: #{tpu_custom_call.1} parent=1 // pred_check
      _
    $region15: #{tpu_custom_call.1} parent=1 // pred_check_branch
      %37 = sbr.rel (0) target = $region17
    $region16: #{tpu_custom_call.1} parent=1 // pred_region
      _
    $region17: #{tpu_custom_call.1} parent=1 // pred_fallthru
      _
    // Predicated region
    $region18: #{tpu_custom_call.1} parent=1 // pred_check
      _
    $region19: #{tpu_custom_call.1} parent=1 // pred_check_branch
      %39 = sbr.rel (0) target = $region21
    $region20: #{tpu_custom_call.1} parent=1 // pred_region
      _
    $region21: #{tpu_custom_call.1} parent=1 // pred_fallthru
      _
    // Predicated region
    $region22: #{tpu_custom_call.1} parent=1 // pred_check
      _
    $region23: #{tpu_custom_call.1} parent=1 // pred_check_branch
      %41 = sbr.rel (0) target = $region25
    $region24: #{tpu_custom_call.1} parent=1 // pred_region
      _
    $region25: #{tpu_custom_call.1} parent=1 // pred_fallthru
      _
    // Predicated region
    $region26: #{tpu_custom_call.1} parent=1 // pred_check
      _
    $region27: #{tpu_custom_call.1} parent=1 // pred_check_branch
      %43 = sbr.rel (0) target = $region29
    $region28: #{tpu_custom_call.1} parent=1 // pred_region
      _
    $region29: #{tpu_custom_call.1} parent=1 // pred_fallthru
      _
    // Predicated region
    $region30: #{tpu_custom_call.1} parent=1 // pred_check
      _
    $region31: #{tpu_custom_call.1} parent=1 // pred_check_branch
      %45 = sbr.rel (0) target = $region33
    $region32: #{tpu_custom_call.1} parent=1 // pred_region
      _
    $region33: #{tpu_custom_call.1} parent=1 // pred_fallthru
      _
    // Predicated region
    $region34: #{tpu_custom_call.1} parent=1 // pred_check
      _
    $region35: #{tpu_custom_call.1} parent=1 // pred_check_branch
      %47 = sbr.rel (0) target = $region37
    $region36: #{tpu_custom_call.1} parent=1 // pred_region
      _
    $region37: #{tpu_custom_call.1} parent=1 // pred_fallthru
      _
    // Predicated region
    $region38: #{tpu_custom_call.1} parent=1 // pred_check
      _
    $region39: #{tpu_custom_call.1} parent=1 // pred_check_branch
      %49 = sbr.rel (0) target = $region41
    $region40: #{tpu_custom_call.1} parent=1 // pred_region
      _
    $region41: #{tpu_custom_call.1} parent=1 // pred_fallthru
      _
    // Predicated region
    $region42: #{tpu_custom_call.1} parent=1 // pred_check
      _
    $region43: #{tpu_custom_call.1} parent=1 // pred_check_branch
      %51 = sbr.rel (0) target = $region45
    $region44: #{tpu_custom_call.1} parent=1 // pred_region
      _
    $region45: #{tpu_custom_call.1} parent=1 // pred_fallthru
      _
    // Predicated region
    $region46: #{tpu_custom_call.1} parent=1 // pred_check
      _
    $region47: #{tpu_custom_call.1} parent=1 // pred_check_branch
      %53 = sbr.rel (0) target = $region49
    $region48: #{tpu_custom_call.1} parent=1 // pred_region
      _
    $region49: #{tpu_custom_call.1} parent=1 // pred_fallthru
      _
    // Predicated region
    $region50: #{tpu_custom_call.1} parent=1 // pred_check
      _
    $region51: #{tpu_custom_call.1} parent=1 // pred_check_branch
      %55 = sbr.rel (0) target = $region53
    $region52: #{tpu_custom_call.1} parent=1 // pred_region
      %s57 = ssub.s32 4096, 4096
      %58 = vsyncadd [#allocation3], %s57
      %s59 = sshll.u32 [#allocation2], 4
      %s60 = int_to_ptr.vmem [resolvable:$true] %s59
      %65 = dma.hbm_to_vmem [thread:$0]  %s12, 4096, %s60, [#allocation3], 128, 128, 8
    $region53: #{tpu_custom_call.1} parent=1 // pred_fallthru
      _
    // Predicated region
    $region54: #{tpu_custom_call.1} parent=1 // pred_check
      _
    $region55: #{tpu_custom_call.1} parent=1 // pred_check_branch
      %67 = sbr.rel (0) target = $region57
    $region56: #{tpu_custom_call.1} parent=1 // pred_region
      _
    $region57: #{tpu_custom_call.1} parent=1 // pred_fallthru
      _
    // Predicated region
    $region58: #{tpu_custom_call.1} parent=1 // pred_check
      _
    $region59: #{tpu_custom_call.1} parent=1 // pred_check_branch
      %69 = sbr.rel (0) target = $region61
    $region60: #{tpu_custom_call.1} parent=1 // pred_region
      %s71 = ssub.s32 2048, 2048
      %72 = vsyncadd [#allocation6], %s71
      %s73 = sshll.u32 [#allocation5], 4
      %s74 = int_to_ptr.vmem [resolvable:$true] %s73
      %79 = dma.hbm_to_vmem [thread:$0]  %s14, 2048, %s74, [#allocation6], 64, 64, 4
    $region61: #{tpu_custom_call.1} parent=1 // pred_fallthru
      _
    // Predicated region
    $region62: #{tpu_custom_call.1} parent=1 // pred_check
      _
    $region63: #{tpu_custom_call.1} parent=1 // pred_check_branch
      %81 = sbr.rel (0) target = $region65
    $region64: #{tpu_custom_call.1} parent=1 // pred_region
      _
    $region65: #{tpu_custom_call.1} parent=1 // pred_fallthru
      _
    // Predicated region
    $region66: #{tpu_custom_call.1} parent=1 // pred_check
      _
    $region67: #{tpu_custom_call.1} parent=1 // pred_check_branch
      %83 = sbr.rel (0) target = $region69
    $region68: #{tpu_custom_call.1} parent=1 // pred_region
      %84 = dma.done [#allocation3], 4096
    $region69: #{tpu_custom_call.1} parent=1 // pred_fallthru
      _
    // Predicated region
    $region70: #{tpu_custom_call.1} parent=1 // pred_check
      _
    $region71: #{tpu_custom_call.1} parent=1 // pred_check_branch
      %86 = sbr.rel (0) target = $region73
    $region72: #{tpu_custom_call.1} parent=1 // pred_region
      %87 = dma.done [#allocation6], 2048
    $region73: #{tpu_custom_call.1} parent=1 // pred_fallthru
      _
    %v89 = vld [vmem:[%s0] sm:$0xff]
    %v90 = vld [vmem:[%s6] sm:$0x3]
    %92 = vset.pattern.permute.xlu0 0
    %93 = vperm.xlu0 %92, %v89
    %v94 = vpop.permute.xlu0 %93
    %v97 = vlaneseq
    %v98 = vshrl.u32 %v97, 7
    %v99 = vsub.s32 0, %v98
    %v100 = vrot.slane %v90, %v99
    %v101 = vlaneseq
    %v102 = vshrl.u32 %v101, 7
    %v103 = vsub.s32 1, %v102
    %v104 = vrot.slane %v90, %v103
    %v107 = vmul.f32 %v94, %v100
    %v108 = vmul.f32 %v94, %v104
    %v109 = vld [vmem:[%s7] sm:$0x3]
    %v111 = vlaneseq
    %v112 = vshrl.u32 %v111, 7
    %v113 = vsub.s32 0, %v112
    %v114 = vrot.slane %v109, %v113
    %v115 = vlaneseq
    %v116 = vshrl.u32 %v115, 7
    %v117 = vsub.s32 1, %v116
    %v118 = vrot.slane %v109, %v117
    %v121 = vadd.f32 %v107, %v114
    %v122 = vadd.f32 %v108, %v118
    %vm123 = vcmp.gt.f32.partialorder %v121, 0.0
    %vm124 = vcmp.gt.f32.partialorder %v122, 0.0
    %v125 = vmul.f32 %v121, 0.1
    %v126 = vmul.f32 %v122, 0.1
    %v127 = vsel %vm123, %v121, %v125
    %v128 = vsel %vm124, %v122, %v126
    %v129 = vpack.c.bf16 %v127, %v127
    %v130 = vpack.c.bf16 %v128, %v128
    %v131 = vld [vmem:[%s8] sm:$0xf]
    %v132 = vld [vmem:[%s8 + $0x4] sm:$0xf]
    %v133 = vld [vmem:[%s8 + $0x8] sm:$0xf]
    %v134 = vld [vmem:[%s8 + $0xc] sm:$0xf]
    %v135 = vld [vmem:[%s8 + $0x10] sm:$0xf]
    %v136 = vld [vmem:[%s8 + $0x14] sm:$0xf]
    %v137 = vld [vmem:[%s8 + $0x18] sm:$0xf]
    %v138 = vld [vmem:[%s8 + $0x1c] sm:$0xf]
    %v139 = vld [vmem:[%s8 + $0x20] sm:$0xf]
    %v140 = vld [vmem:[%s8 + $0x24] sm:$0xf]
    %v141 = vld [vmem:[%s8 + $0x28] sm:$0xf]
    %v142 = vld [vmem:[%s8 + $0x2c] sm:$0xf]
    %v143 = vld [vmem:[%s8 + $0x30] sm:$0xf]
    %v144 = vld [vmem:[%s8 + $0x34] sm:$0xf]
    %v145 = vld [vmem:[%s8 + $0x38] sm:$0xf]
    %v146 = vld [vmem:[%s8 + $0x3c] sm:$0xf]
    %v147 = vld [vmem:[%s8 + $0x40] sm:$0xf]
    %v148 = vld [vmem:[%s8 + $0x44] sm:$0xf]
    %v149 = vld [vmem:[%s8 + $0x48] sm:$0xf]
    %v150 = vld [vmem:[%s8 + $0x4c] sm:$0xf]
    %v151 = vld [vmem:[%s8 + $0x50] sm:$0xf]
    %v152 = vld [vmem:[%s8 + $0x54] sm:$0xf]
    %v153 = vld [vmem:[%s8 + $0x58] sm:$0xf]
    %v154 = vld [vmem:[%s8 + $0x5c] sm:$0xf]
    %v155 = vld [vmem:[%s8 + $0x60] sm:$0xf]
    %v156 = vld [vmem:[%s8 + $0x64] sm:$0xf]
    %v157 = vld [vmem:[%s8 + $0x68] sm:$0xf]
    %v158 = vld [vmem:[%s8 + $0x6c] sm:$0xf]
    %v159 = vld [vmem:[%s8 + $0x70] sm:$0xf]
    %v160 = vld [vmem:[%s8 + $0x74] sm:$0xf]
    %v161 = vld [vmem:[%s8 + $0x78] sm:$0xf]
    %v162 = vld [vmem:[%s8 + $0x7c] sm:$0xf]
    %v163 = vld [vmem:[%s9] sm:$0x1]
    %v165 = vlaneseq
    %v166 = vshrl.u32 %v165, 7
    %v167 = vsub.s32 0, %v166
    %v168 = vrot.slane %v163, %v167
    %v202 = vunpack.c.l.b16 %v131
    %v203 = vunpack.c.l.b16 %v132
    %v204 = vunpack.c.l.b16 %v133
    %v205 = vunpack.c.l.b16 %v134
    %v206 = vunpack.c.l.b16 %v135
    %v207 = vunpack.c.l.b16 %v136
    %v208 = vunpack.c.l.b16 %v137
    %v209 = vunpack.c.l.b16 %v138
    %v210 = vunpack.c.l.b16 %v139
    %v211 = vunpack.c.l.b16 %v140
    %v212 = vunpack.c.l.b16 %v141
    %v213 = vunpack.c.l.b16 %v142
    %v214 = vunpack.c.l.b16 %v143
    %v215 = vunpack.c.l.b16 %v144
    %v216 = vunpack.c.l.b16 %v145
    %v217 = vunpack.c.l.b16 %v146
    %v218 = vunpack.c.l.b16 %v147
    %v219 = vunpack.c.l.b16 %v148
    %v220 = vunpack.c.l.b16 %v149
    %v221 = vunpack.c.l.b16 %v150
    %v222 = vunpack.c.l.b16 %v151
    %v223 = vunpack.c.l.b16 %v152
    %v224 = vunpack.c.l.b16 %v153
    %v225 = vunpack.c.l.b16 %v154
    %v226 = vunpack.c.l.b16 %v155
    %v227 = vunpack.c.l.b16 %v156
    %v228 = vunpack.c.l.b16 %v157
    %v229 = vunpack.c.l.b16 %v158
    %v230 = vunpack.c.l.b16 %v159
    %v231 = vunpack.c.l.b16 %v160
    %v232 = vunpack.c.l.b16 %v161
    %v233 = vunpack.c.l.b16 %v162
    %v234 = vpack.c.b16 %v203, %v202
    %v235 = vpack.c.b16 %v205, %v204
    %v236 = vpack.c.b16 %v207, %v206
    %v237 = vpack.c.b16 %v209, %v208
    %v238 = vpack.c.b16 %v211, %v210
    %v239 = vpack.c.b16 %v213, %v212
    %v240 = vpack.c.b16 %v215, %v214
    %v241 = vpack.c.b16 %v217, %v216
    %v242 = vpack.c.b16 %v219, %v218
    %v243 = vpack.c.b16 %v221, %v220
    %v244 = vpack.c.b16 %v223, %v222
    %v245 = vpack.c.b16 %v225, %v224
    %v246 = vpack.c.b16 %v227, %v226
    %v247 = vpack.c.b16 %v229, %v228
    %v248 = vpack.c.b16 %v231, %v230
    %v249 = vpack.c.b16 %v233, %v232
    %266 = vmatprep.subr.bf16.mxu0 0
    %267 = vmatpush1.bf16.msra.mxu0 %v241
    %268 = vmatprep.subr.bf16.mxu0 0
    %269 = vmatpush1.bf16.msra.mxu0 %v240
    %270 = vmatprep.subr.bf16.mxu0 0
    %271 = vmatpush1.bf16.msra.mxu0 %v239
    %272 = vmatprep.subr.bf16.mxu0 0
    %273 = vmatpush1.bf16.msra.mxu0 %v238
    %274 = vmatprep.subr.bf16.mxu0 0
    %275 = vmatpush1.bf16.msra.mxu0 %v237
    %276 = vmatprep.subr.bf16.mxu0 0
    %277 = vmatpush1.bf16.msra.mxu0 %v236
    %278 = vmatprep.subr.bf16.mxu0 0
    %279 = vmatpush1.bf16.msra.mxu0 %v235
    %280 = vmatprep.subr.bf16.mxu0 0
    %281 = vmatpush1.bf16.msra.mxu0 %v234
    %282 = vmatprep.subr.bf16.mxu0 0
    %283 = vmatpush2.bf16.msra.mxu0 %v249
    %284 = vmatprep.subr.bf16.mxu0 0
    %285 = vmatpush2.bf16.msra.mxu0 %v248
    %286 = vmatprep.subr.bf16.mxu0 0
    %287 = vmatpush2.bf16.msra.mxu0 %v247
    %288 = vmatprep.subr.bf16.mxu0 0
    %289 = vmatpush2.bf16.msra.mxu0 %v246
    %290 = vmatprep.subr.bf16.mxu0 0
    %291 = vmatpush2.bf16.msra.mxu0 %v245
    %292 = vmatprep.subr.bf16.mxu0 0
    %293 = vmatpush2.bf16.msra.mxu0 %v244
    %294 = vmatprep.subr.bf16.mxu0 0
    %295 = vmatpush2.bf16.msra.mxu0 %v243
    %296 = vmatprep.subr.bf16.mxu0 0
    %297 = vmatpush2.bf16.msra.mxu0 %v242
    %298 = vmatprep.mubr.bf16.mxu0 %v130
    %299 = vmatmul.mubr.bf16.gmra.mxu0 %v129
    %v300 = vpop.f32.mrf.mxu0
    %v301 = vadd.f32 %v168, %v300
    %v302 = vpop.f32.mrf.mxu0
    %v303 = vpop.f32.mrf.mxu0
    %v304 = vpop.f32.mrf.mxu0
    %305 = vdwg.mxu0
    %v306 = vld [vmem:[%s1] sm:$0xff]
    %v307 = vadd.f32 %v306, 1e-20
    %v308 = vlog2.pop %v307
    %v309 = vmul.f32 %v308, 0.6931472
    %v310 = vsub.f32 0.0, %v309
    %v311 = vadd.f32 %v310, 1e-20
    %v312 = vlog2.pop %v311
    %v313 = vmul.f32 %v312, 0.6931472
    %v314 = vsub.f32 0.0, %v313
    %v315 = vadd.f32 %v301, %v314
    %v316 = vlaneseq
    %v317 = vand.u32 %v316, 127
    %318 = vmax.xlane.f32.xlu0 %v315
    %v319 = vpop.xlane.xlu0 %318
    %vm320 = vcmp.eq.f32.partialorder %v315, %v319
    %v321 = vsel %vm320, %v317, 128
    %v322 = vand.u32 %v321, 65535
    %v323 = vshra.s32 %v321, 16
    %v324 = vcvt.s32.f32 %v322
    %v325 = vcvt.s32.f32 %v323
    %326 = vmin.xlane.f32.xlu0 %v325
    %v327 = vpop.xlane.xlu0 %326
    %vm328 = vcmp.eq.f32.partialorder %v325, %v327
    %v329 = vsel %vm328, %v324, inf
    %330 = vmin.xlane.f32.xlu0 %v329
    %v331 = vpop.xlane.xlu0 %330
    %v332 = vcvt.f32.s32 %v331
    %v333 = vcvt.f32.s32 %v327
    %v334 = vshll.u32 %v333, 16
    %v335 = vadd.s32 %v334, %v332
    %vm336 = vcmp.eq.s32.totalorder %v317, %v335
    %v337 = vsel %vm336, 1, 0
    %v338 = vcvt.s32.f32 %v337
    %v339 = vadd.f32 %v301, 1e-20
    %340 = vmax.xlane.f32.xlu0 %v339
    %v341 = vpop.xlane.xlu0 %340
    %v342 = vsub.f32 %v339, %v341
    %v343 = vmul.f32 %v342, 1.442695
    %v344 = vpow.pop %v343
    %345 = vadd.xlane.f32.xlu0 %v344
    %v346 = vpop.xlane.xlu0 %345
    %v347 = vrcp.pop %v346
    %v348 = vmul.f32 %v344, %v347
    %v349 = vld [vmem:[%s5] sm:$0x1]
    %v350 = vadd.f32 %v348, 1e-20
    %v352 = vlaneseq
    %v353 = vshrl.u32 %v352, 7
    %v354 = vsub.s32 0, %v353
    %v355 = vrot.slane %v349, %v354
    %v357 = vmul.f32 %v355, %v350
    %358 = vadd.xlane.f32.xlu0 %v357
    %v359 = vpop.xlane.xlu0 %358
    %v360 = vrsqrt.pop %v359
    %v361 = vld [vmem:[%s3] sm:$0x3]
    %v363 = vlaneseq
    %v364 = vshrl.u32 %v363, 7
    %v365 = vsub.s32 0, %v364
    %v366 = vrot.slane %v360, %v365
    %v367 = vlaneseq
    %v368 = vshrl.u32 %v367, 7
    %v369 = vsub.s32 1, %v368
    %v370 = vrot.slane %v360, %v369
    %v371 = vlaneseq
    %v372 = vshrl.u32 %v371, 7
    %v373 = vsub.s32 2, %v372
    %v374 = vrot.slane %v360, %v373
    %v375 = vlaneseq
    %v376 = vshrl.u32 %v375, 7
    %v377 = vsub.s32 3, %v376
    %v378 = vrot.slane %v360, %v377
    %v379 = vlaneseq
    %v380 = vshrl.u32 %v379, 7
    %v381 = vsub.s32 4, %v380
    %v382 = vrot.slane %v360, %v381
    %v383 = vlaneseq
    %v384 = vshrl.u32 %v383, 7
    %v385 = vsub.s32 5, %v384
    %v386 = vrot.slane %v360, %v385
    %v387 = vlaneseq
    %v388 = vshrl.u32 %v387, 7
    %v389 = vsub.s32 6, %v388
    %v390 = vrot.slane %v360, %v389
    %v391 = vlaneseq
    %v392 = vshrl.u32 %v391, 7
    %v393 = vsub.s32 7, %v392
    %v394 = vrot.slane %v360, %v393
    %v403 = vmul.f32 %v361, %v366
    %v404 = vmul.f32 %v361, %v370
    %v405 = vmul.f32 %v361, %v374
    %v406 = vmul.f32 %v361, %v378
    %v407 = vmul.f32 %v361, %v382
    %v408 = vmul.f32 %v361, %v386
    %v409 = vmul.f32 %v361, %v390
    %v410 = vmul.f32 %v361, %v394
    %v411 = vld [vmem:[%s4] sm:$0xff]
    %v412 = vld [vmem:[%s4 + $0x8] sm:$0xff]
    %v413 = vld [vmem:[%s4 + $0x10] sm:$0xff]
    %v414 = vld [vmem:[%s4 + $0x18] sm:$0xff]
    %v415 = vld [vmem:[%s4 + $0x20] sm:$0xff]
    %v416 = vld [vmem:[%s4 + $0x28] sm:$0xff]
    %v417 = vld [vmem:[%s4 + $0x30] sm:$0xff]
    %v418 = vld [vmem:[%s4 + $0x38] sm:$0xff]
    %v419 = vld [vmem:[%s4 + $0x40] sm:$0xff]
    %v420 = vld [vmem:[%s4 + $0x48] sm:$0xff]
    %v421 = vld [vmem:[%s4 + $0x50] sm:$0xff]
    %v422 = vld [vmem:[%s4 + $0x58] sm:$0xff]
    %v423 = vld [vmem:[%s4 + $0x60] sm:$0xff]
    %v424 = vld [vmem:[%s4 + $0x68] sm:$0xff]
    %v425 = vld [vmem:[%s4 + $0x70] sm:$0xff]
    %v426 = vld [vmem:[%s4 + $0x78] sm:$0xff]
    %427 = vmatprep.subr.mxu0 0.0
    %428 = vmatpush1.msra.mxu0 %v426
    %429 = vmatprep.subr.mxu0 0.0
    %430 = vmatpush1.msra.mxu0 %v425
    %431 = vmatprep.subr.mxu0 0.0
    %432 = vmatpush1.msra.mxu0 %v424
    %433 = vmatprep.subr.mxu0 0.0
    %434 = vmatpush1.msra.mxu0 %v423
    %435 = vmatprep.subr.mxu0 0.0
    %436 = vmatpush1.msra.mxu0 %v422
    %437 = vmatprep.subr.mxu0 0.0
    %438 = vmatpush1.msra.mxu0 %v421
    %439 = vmatprep.subr.mxu0 0.0
    %440 = vmatpush1.msra.mxu0 %v420
    %441 = vmatprep.subr.mxu0 0.0
    %442 = vmatpush1.msra.mxu0 %v419
    %443 = vmatprep.subr.mxu0 0.0
    %444 = vmatpush1.msra.mxu0 %v418
    %445 = vmatprep.subr.mxu0 0.0
    %446 = vmatpush1.msra.mxu0 %v417
    %447 = vmatprep.subr.mxu0 0.0
    %448 = vmatpush1.msra.mxu0 %v416
    %449 = vmatprep.subr.mxu0 0.0
    %450 = vmatpush1.msra.mxu0 %v415
    %451 = vmatprep.subr.mxu0 0.0
    %452 = vmatpush1.msra.mxu0 %v414
    %453 = vmatprep.subr.mxu0 0.0
    %454 = vmatpush1.msra.mxu0 %v413
    %455 = vmatprep.subr.mxu0 0.0
    %456 = vmatpush1.msra.mxu0 %v412
    %457 = vmatprep.subr.mxu0 0.0
    %458 = vmatpush1.msra.mxu0 %v411
    %459 = vmatprep.subr.mxu0 0.0
    %460 = vmatpush2.msra.mxu0 0.0
    %461 = vmatprep.subr.mxu0 0.0
    %462 = vmatpush2.msra.mxu0 0.0
    %463 = vmatprep.subr.mxu0 0.0
    %464 = vmatpush2.msra.mxu0 0.0
    %465 = vmatprep.subr.mxu0 0.0
    %466 = vmatpush2.msra.mxu0 0.0
    %467 = vmatprep.subr.mxu0 0.0
    %468 = vmatpush2.msra.mxu0 0.0
    %469 = vmatprep.subr.mxu0 0.0
    %470 = vmatpush2.msra.mxu0 0.0
    %471 = vmatprep.subr.mxu0 0.0
    %472 = vmatpush2.msra.mxu0 0.0
    %473 = vmatprep.subr.mxu0 0.0
    %474 = vmatpush2.msra.mxu0 0.0
    %475 = vmatprep.subr.mxu0 0.0
    %476 = vmatpush2.msra.mxu0 0.0
    %477 = vmatprep.subr.mxu0 0.0
    %478 = vmatpush2.msra.mxu0 0.0
    %479 = vmatprep.subr.mxu0 0.0
    %480 = vmatpush2.msra.mxu0 0.0
    %481 = vmatprep.subr.mxu0 0.0
    %482 = vmatpush2.msra.mxu0 0.0
    %483 = vmatprep.subr.mxu0 0.0
    %484 = vmatpush2.msra.mxu0 0.0
    %485 = vmatprep.subr.mxu0 0.0
    %486 = vmatpush2.msra.mxu0 0.0
    %487 = vmatprep.subr.mxu0 0.0
    %488 = vmatpush2.msra.mxu0 0.0
    %489 = vmatprep.subr.mxu0 0.0
    %490 = vmatpush2.msra.mxu0 0.0
    %491 = vmatprep.mubr.f32.mxu0 0.0
    %492 = vmatmul.mubr.f32.gmra.mxu0 %v338
    %v493 = vpop.f32.mrf.mxu0
    %v494 = vadd.f32 0.0, %v493
    %v495 = vpop.f32.mrf.mxu0
    %496 = vdwg.mxu0
    %v497 = vsub.f32 0.0, %v89
    %v498 = vmul.f32 %v497, 0.115129255
    %v499 = vmul.f32 %v498, 1.442695
    %v500 = vpow.pop %v499
    %v501 = vmul.f32 %v500, 0.37796447
    %v502 = vmul.f32 %v494, %v360
    %v503 = vld [vmem:[%s2] sm:$0xff]
    %505 = vset.pattern.permute.xlu0 0
    %506 = vperm.xlu0 %505, %v501
    %v507 = vpop.permute.xlu0 %506
    %v509 = vmul.f32 %v503, %v507
    %v510 = vadd.f32 %v502, %v509
    %v511 = vld [vmem:[%s10] sm:$0x77]
    %513 = vset.pattern.permute.xlu0 0
    %514 = vperm.xlu0 %513, %v510
    %v515 = vpop.permute.xlu0 %514
    %v518 = vlaneseq
    %v519 = vshrl.u32 %v518, 7
    %v520 = vsub.s32 0, %v519
    %v521 = vrot.slane %v511, %v520
    %v522 = vlaneseq
    %v523 = vshrl.u32 %v522, 7
    %v524 = vsub.s32 4, %v523
    %v525 = vrot.slane %v511, %v524
    %v528 = vlaneseq
    %v529 = vshrl.u32 %v528, 7
    %v530 = vsub.s32 0, %v529
    %v531 = vrot.slane %v521, %v530
    %v532 = vlaneseq
    %v533 = vshrl.u32 %v532, 7
    %v534 = vsub.s32 0, %v533
    %v535 = vrot.slane %v525, %v534
    %v536 = vmul.f32 %v515, %v531
    %v537 = vmul.f32 %v515, %v535
    %538 = vset.pattern.permute.xlu0 1
    %539 = vperm.xlu0 %538, %v510
    %v540 = vpop.permute.xlu0 %539
    %v542 = vlaneseq
    %v543 = vshrl.u32 %v542, 7
    %v544 = vsub.s32 1, %v543
    %v545 = vrot.slane %v511, %v544
    %v546 = vlaneseq
    %v547 = vshrl.u32 %v546, 7
    %v548 = vsub.s32 5, %v547
    %v549 = vrot.slane %v511, %v548
    %v552 = vlaneseq
    %v553 = vshrl.u32 %v552, 7
    %v554 = vsub.s32 1, %v553
    %v555 = vrot.slane %v545, %v554
    %v556 = vlaneseq
    %v557 = vshrl.u32 %v556, 7
    %v558 = vsub.s32 1, %v557
    %v559 = vrot.slane %v549, %v558
    %v560 = vmul.f32 %v540, %v555
    %v561 = vmul.f32 %v540, %v559
    %v562 = vadd.f32 %v536, %v560
    %v563 = vadd.f32 %v537, %v561
    %v564 = vlaneseq
    %v565 = vshrl.u32 %v564, 7
    %v566 = vsub.s32 2, %v565
    %v567 = vrot.slane %v511, %v566
    %v568 = vlaneseq
    %v569 = vshrl.u32 %v568, 7
    %v570 = vsub.s32 6, %v569
    %v571 = vrot.slane %v511, %v570
    %v574 = vlaneseq
    %v575 = vshrl.u32 %v574, 7
    %v576 = vsub.s32 2, %v575
    %v577 = vrot.slane %v567, %v576
    %v578 = vlaneseq
    %v579 = vshrl.u32 %v578, 7
    %v580 = vsub.s32 2, %v579
    %v581 = vrot.slane %v571, %v580
    %v582 = vmul.f32 %v94, %v577
    %v583 = vmul.f32 %v94, %v581
    %v584 = vadd.f32 %v562, %v582
    %v585 = vadd.f32 %v563, %v583
    %v586 = vld [vmem:[%s11] sm:$0x3]
    %v588 = vlaneseq
    %v589 = vshrl.u32 %v588, 7
    %v590 = vsub.s32 0, %v589
    %v591 = vrot.slane %v586, %v590
    %v592 = vlaneseq
    %v593 = vshrl.u32 %v592, 7
    %v594 = vsub.s32 1, %v593
    %v595 = vrot.slane %v586, %v594
    %v598 = vadd.f32 %v584, %v591
    %v599 = vadd.f32 %v585, %v595
    %vm600 = vcmp.gt.f32.partialorder %v598, 0.0
    %vm601 = vcmp.gt.f32.partialorder %v599, 0.0
    %v602 = vmul.f32 %v598, 0.1
    %v603 = vmul.f32 %v599, 0.1
    %v604 = vsel %vm600, %v598, %v602
    %v605 = vsel %vm601, %v599, %v603
    %v606 = vpack.c.bf16 %v604, %v604
    %v607 = vpack.c.bf16 %v605, %v605
    %v608 = vld [vmem:[#allocation2] sm:$0xff]
    %v609 = vld [vmem:[#allocation2 + $0x8] sm:$0xff]
    %v610 = vld [vmem:[#allocation2 + $0x10] sm:$0xff]
    %v611 = vld [vmem:[#allocation2 + $0x18] sm:$0xff]
    %v612 = vld [vmem:[#allocation2 + $0x20] sm:$0xff]
    %v613 = vld [vmem:[#allocation2 + $0x28] sm:$0xff]
    %v614 = vld [vmem:[#allocation2 + $0x30] sm:$0xff]
    %v615 = vld [vmem:[#allocation2 + $0x38] sm:$0xff]
    %v616 = vld [vmem:[#allocation2 + $0x40] sm:$0xff]
    %v617 = vld [vmem:[#allocation2 + $0x48] sm:$0xff]
    %v618 = vld [vmem:[#allocation2 + $0x50] sm:$0xff]
    %v619 = vld [vmem:[#allocation2 + $0x58] sm:$0xff]
    %v620 = vld [vmem:[#allocation2 + $0x60] sm:$0xff]
    %v621 = vld [vmem:[#allocation2 + $0x68] sm:$0xff]
    %v622 = vld [vmem:[#allocation2 + $0x70] sm:$0xff]
    %v623 = vld [vmem:[#allocation2 + $0x78] sm:$0xff]
    %v624 = vld [vmem:[#allocation2 + $0x80] sm:$0xff]
    %v625 = vld [vmem:[#allocation2 + $0x88] sm:$0xff]
    %v626 = vld [vmem:[#allocation2 + $0x90] sm:$0xff]
    %v627 = vld [vmem:[#allocation2 + $0x98] sm:$0xff]
    %v628 = vld [vmem:[#allocation2 + $0xa0] sm:$0xff]
    %v629 = vld [vmem:[#allocation2 + $0xa8] sm:$0xff]
    %v630 = vld [vmem:[#allocation2 + $0xb0] sm:$0xff]
    %v631 = vld [vmem:[#allocation2 + $0xb8] sm:$0xff]
    %v632 = vld [vmem:[#allocation2 + $0xc0] sm:$0xff]
    %v633 = vld [vmem:[#allocation2 + $0xc8] sm:$0xff]
    %v634 = vld [vmem:[#allocation2 + $0xd0] sm:$0xff]
    %v635 = vld [vmem:[#allocation2 + $0xd8] sm:$0xff]
    %v636 = vld [vmem:[#allocation2 + $0xe0] sm:$0xff]
    %v637 = vld [vmem:[#allocation2 + $0xe8] sm:$0xff]
    %v638 = vld [vmem:[#allocation2 + $0xf0] sm:$0xff]
    %v639 = vld [vmem:[#allocation2 + $0xf8] sm:$0xff]
    %v640 = vld [vmem:[%s13] sm:$0x3]
    %v642 = vlaneseq
    %v643 = vshrl.u32 %v642, 7
    %v644 = vsub.s32 0, %v643
    %v645 = vrot.slane %v640, %v644
    %v646 = vlaneseq
    %v647 = vshrl.u32 %v646, 7
    %v648 = vsub.s32 1, %v647
    %v649 = vrot.slane %v640, %v648
    %v684 = vunpack.c.l.b16 %v608
    %v685 = vunpack.c.h.b16 %v608
    %v686 = vunpack.c.l.b16 %v609
    %v687 = vunpack.c.h.b16 %v609
    %v688 = vunpack.c.l.b16 %v610
    %v689 = vunpack.c.h.b16 %v610
    %v690 = vunpack.c.l.b16 %v611
    %v691 = vunpack.c.h.b16 %v611
    %v692 = vunpack.c.l.b16 %v612
    %v693 = vunpack.c.h.b16 %v612
    %v694 = vunpack.c.l.b16 %v613
    %v695 = vunpack.c.h.b16 %v613
    %v696 = vunpack.c.l.b16 %v614
    %v697 = vunpack.c.h.b16 %v614
    %v698 = vunpack.c.l.b16 %v615
    %v699 = vunpack.c.h.b16 %v615
    %v700 = vunpack.c.l.b16 %v616
    %v701 = vunpack.c.h.b16 %v616
    %v702 = vunpack.c.l.b16 %v617
    %v703 = vunpack.c.h.b16 %v617
    %v704 = vunpack.c.l.b16 %v618
    %v705 = vunpack.c.h.b16 %v618
    %v706 = vunpack.c.l.b16 %v619
    %v707 = vunpack.c.h.b16 %v619
    %v708 = vunpack.c.l.b16 %v620
    %v709 = vunpack.c.h.b16 %v620
    %v710 = vunpack.c.l.b16 %v621
    %v711 = vunpack.c.h.b16 %v621
    %v712 = vunpack.c.l.b16 %v622
    %v713 = vunpack.c.h.b16 %v622
    %v714 = vunpack.c.l.b16 %v623
    %v715 = vunpack.c.h.b16 %v623
    %v716 = vunpack.c.l.b16 %v624
    %v717 = vunpack.c.h.b16 %v624
    %v718 = vunpack.c.l.b16 %v625
    %v719 = vunpack.c.h.b16 %v625
    %v720 = vunpack.c.l.b16 %v626
    %v721 = vunpack.c.h.b16 %v626
    %v722 = vunpack.c.l.b16 %v627
    %v723 = vunpack.c.h.b16 %v627
    %v724 = vunpack.c.l.b16 %v628
    %v725 = vunpack.c.h.b16 %v628
    %v726 = vunpack.c.l.b16 %v629
    %v727 = vunpack.c.h.b16 %v629
    %v728 = vunpack.c.l.b16 %v630
    %v729 = vunpack.c.h.b16 %v630
    %v730 = vunpack.c.l.b16 %v631
    %v731 = vunpack.c.h.b16 %v631
    %v732 = vunpack.c.l.b16 %v632
    %v733 = vunpack.c.h.b16 %v632
    %v734 = vunpack.c.l.b16 %v633
    %v735 = vunpack.c.h.b16 %v633
    %v736 = vunpack.c.l.b16 %v634
    %v737 = vunpack.c.h.b16 %v634
    %v738 = vunpack.c.l.b16 %v635
    %v739 = vunpack.c.h.b16 %v635
    %v740 = vunpack.c.l.b16 %v636
    %v741 = vunpack.c.h.b16 %v636
    %v742 = vunpack.c.l.b16 %v637
    %v743 = vunpack.c.h.b16 %v637
    %v744 = vunpack.c.l.b16 %v638
    %v745 = vunpack.c.h.b16 %v638
    %v746 = vunpack.c.l.b16 %v639
    %v747 = vunpack.c.h.b16 %v639
    %v748 = vpack.c.b16 %v686, %v684
    %v749 = vpack.c.b16 %v687, %v685
    %v750 = vpack.c.b16 %v690, %v688
    %v751 = vpack.c.b16 %v691, %v689
    %v752 = vpack.c.b16 %v694, %v692
    %v753 = vpack.c.b16 %v695, %v693
    %v754 = vpack.c.b16 %v698, %v696
    %v755 = vpack.c.b16 %v699, %v697
    %v756 = vpack.c.b16 %v702, %v700
    %v757 = vpack.c.b16 %v703, %v701
    %v758 = vpack.c.b16 %v706, %v704
    %v759 = vpack.c.b16 %v707, %v705
    %v760 = vpack.c.b16 %v710, %v708
    %v761 = vpack.c.b16 %v711, %v709
    %v762 = vpack.c.b16 %v714, %v712
    %v763 = vpack.c.b16 %v715, %v713
    %v764 = vpack.c.b16 %v718, %v716
    %v765 = vpack.c.b16 %v719, %v717
    %v766 = vpack.c.b16 %v722, %v720
    %v767 = vpack.c.b16 %v723, %v721
    %v768 = vpack.c.b16 %v726, %v724
    %v769 = vpack.c.b16 %v727, %v725
    %v770 = vpack.c.b16 %v730, %v728
    %v771 = vpack.c.b16 %v731, %v729
    %v772 = vpack.c.b16 %v734, %v732
    %v773 = vpack.c.b16 %v735, %v733
    %v774 = vpack.c.b16 %v738, %v736
    %v775 = vpack.c.b16 %v739, %v737
    %v776 = vpack.c.b16 %v742, %v740
    %v777 = vpack.c.b16 %v743, %v741
    %v778 = vpack.c.b16 %v746, %v744
    %v779 = vpack.c.b16 %v747, %v745
    %812 = vmatprep.subr.bf16.mxu0 %v763
    %813 = vmatpush1.bf16.msra.mxu0 %v762
    %814 = vmatprep.subr.bf16.mxu0 %v761
    %815 = vmatpush1.bf16.msra.mxu0 %v760
    %816 = vmatprep.subr.bf16.mxu0 %v759
    %817 = vmatpush1.bf16.msra.mxu0 %v758
    %818 = vmatprep.subr.bf16.mxu0 %v757
    %819 = vmatpush1.bf16.msra.mxu0 %v756
    %820 = vmatprep.subr.bf16.mxu0 %v755
    %821 = vmatpush1.bf16.msra.mxu0 %v754
    %822 = vmatprep.subr.bf16.mxu0 %v753
    %823 = vmatpush1.bf16.msra.mxu0 %v752
    %824 = vmatprep.subr.bf16.mxu0 %v751
    %825 = vmatpush1.bf16.msra.mxu0 %v750
    %826 = vmatprep.subr.bf16.mxu0 %v749
    %827 = vmatpush1.bf16.msra.mxu0 %v748
    %828 = vmatprep.subr.bf16.mxu0 %v779
    %829 = vmatpush2.bf16.msra.mxu0 %v778
    %830 = vmatprep.subr.bf16.mxu0 %v777
    %831 = vmatpush2.bf16.msra.mxu0 %v776
    %832 = vmatprep.subr.bf16.mxu0 %v775
    %833 = vmatpush2.bf16.msra.mxu0 %v774
    %834 = vmatprep.subr.bf16.mxu0 %v773
    %835 = vmatpush2.bf16.msra.mxu0 %v772
    %836 = vmatprep.subr.bf16.mxu0 %v771
    %837 = vmatpush2.bf16.msra.mxu0 %v770
    %838 = vmatprep.subr.bf16.mxu0 %v769
    %839 = vmatpush2.bf16.msra.mxu0 %v768
    %840 = vmatprep.subr.bf16.mxu0 %v767
    %841 = vmatpush2.bf16.msra.mxu0 %v766
    %842 = vmatprep.subr.bf16.mxu0 %v765
    %843 = vmatpush2.bf16.msra.mxu0 %v764
    %844 = vmatprep.mubr.bf16.mxu0 %v607
    %845 = vmatmul.mubr.bf16.gmra.mxu0 %v606
    %v846 = vpop.f32.mrf.mxu0
    %v847 = vadd.f32 %v645, %v846
    %v848 = vpop.f32.mrf.mxu0
    %v849 = vadd.f32 %v649, %v848
    %v850 = vpop.f32.mrf.mxu0
    %v851 = vpop.f32.mrf.mxu0
    %852 = vdwg.mxu0
    %vm853 = vcmp.gt.f32.partialorder %v847, 0.0
    %vm854 = vcmp.gt.f32.partialorder %v849, 0.0
    %v855 = vmul.f32 %v847, 0.1
    %v856 = vmul.f32 %v849, 0.1
    %v857 = vsel %vm853, %v847, %v855
    %v858 = vsel %vm854, %v849, %v856
    %v859 = vpack.c.bf16 %v857, %v857
    %v860 = vpack.c.bf16 %v858, %v858
    %v861 = vld [vmem:[#allocation5] sm:$0xf]
    %v862 = vld [vmem:[#allocation5 + $0x4] sm:$0xf]
    %v863 = vld [vmem:[#allocation5 + $0x8] sm:$0xf]
    %v864 = vld [vmem:[#allocation5 + $0xc] sm:$0xf]
    %v865 = vld [vmem:[#allocation5 + $0x10] sm:$0xf]
    %v866 = vld [vmem:[#allocation5 + $0x14] sm:$0xf]
    %v867 = vld [vmem:[#allocation5 + $0x18] sm:$0xf]
    %v868 = vld [vmem:[#allocation5 + $0x1c] sm:$0xf]
    %v869 = vld [vmem:[#allocation5 + $0x20] sm:$0xf]
    %v870 = vld [vmem:[#allocation5 + $0x24] sm:$0xf]
    %v871 = vld [vmem:[#allocation5 + $0x28] sm:$0xf]
    %v872 = vld [vmem:[#allocation5 + $0x2c] sm:$0xf]
    %v873 = vld [vmem:[#allocation5 + $0x30] sm:$0xf]
    %v874 = vld [vmem:[#allocation5 + $0x34] sm:$0xf]
    %v875 = vld [vmem:[#allocation5 + $0x38] sm:$0xf]
    %v876 = vld [vmem:[#allocation5 + $0x3c] sm:$0xf]
    %v877 = vld [vmem:[#allocation5 + $0x40] sm:$0xf]
    %v878 = vld [vmem:[#allocation5 + $0x44] sm:$0xf]
    %v879 = vld [vmem:[#allocation5 + $0x48] sm:$0xf]
    %v880 = vld [vmem:[#allocation5 + $0x4c] sm:$0xf]
    %v881 = vld [vmem:[#allocation5 + $0x50] sm:$0xf]
    %v882 = vld [vmem:[#allocation5 + $0x54] sm:$0xf]
    %v883 = vld [vmem:[#allocation5 + $0x58] sm:$0xf]
    %v884 = vld [vmem:[#allocation5 + $0x5c] sm:$0xf]
    %v885 = vld [vmem:[#allocation5 + $0x60] sm:$0xf]
    %v886 = vld [vmem:[#allocation5 + $0x64] sm:$0xf]
    %v887 = vld [vmem:[#allocation5 + $0x68] sm:$0xf]
    %v888 = vld [vmem:[#allocation5 + $0x6c] sm:$0xf]
    %v889 = vld [vmem:[#allocation5 + $0x70] sm:$0xf]
    %v890 = vld [vmem:[#allocation5 + $0x74] sm:$0xf]
    %v891 = vld [vmem:[#allocation5 + $0x78] sm:$0xf]
    %v892 = vld [vmem:[#allocation5 + $0x7c] sm:$0xf]
    %v893 = vld [vmem:[%s15] sm:$0x1]
    %v895 = vlaneseq
    %v896 = vshrl.u32 %v895, 7
    %v897 = vsub.s32 0, %v896
    %v898 = vrot.slane %v893, %v897
    %v932 = vunpack.c.l.b16 %v861
    %v933 = vunpack.c.l.b16 %v862
    %v934 = vunpack.c.l.b16 %v863
    %v935 = vunpack.c.l.b16 %v864
    %v936 = vunpack.c.l.b16 %v865
    %v937 = vunpack.c.l.b16 %v866
    %v938 = vunpack.c.l.b16 %v867
    %v939 = vunpack.c.l.b16 %v868
    %v940 = vunpack.c.l.b16 %v869
    %v941 = vunpack.c.l.b16 %v870
    %v942 = vunpack.c.l.b16 %v871
    %v943 = vunpack.c.l.b16 %v872
    %v944 = vunpack.c.l.b16 %v873
    %v945 = vunpack.c.l.b16 %v874
    %v946 = vunpack.c.l.b16 %v875
    %v947 = vunpack.c.l.b16 %v876
    %v948 = vunpack.c.l.b16 %v877
    %v949 = vunpack.c.l.b16 %v878
    %v950 = vunpack.c.l.b16 %v879
    %v951 = vunpack.c.l.b16 %v880
    %v952 = vunpack.c.l.b16 %v881
    %v953 = vunpack.c.l.b16 %v882
    %v954 = vunpack.c.l.b16 %v883
    %v955 = vunpack.c.l.b16 %v884
    %v956 = vunpack.c.l.b16 %v885
    %v957 = vunpack.c.l.b16 %v886
    %v958 = vunpack.c.l.b16 %v887
    %v959 = vunpack.c.l.b16 %v888
    %v960 = vunpack.c.l.b16 %v889
    %v961 = vunpack.c.l.b16 %v890
    %v962 = vunpack.c.l.b16 %v891
    %v963 = vunpack.c.l.b16 %v892
    %v964 = vpack.c.b16 %v933, %v932
    %v965 = vpack.c.b16 %v935, %v934
    %v966 = vpack.c.b16 %v937, %v936
    %v967 = vpack.c.b16 %v939, %v938
    %v968 = vpack.c.b16 %v941, %v940
    %v969 = vpack.c.b16 %v943, %v942
    %v970 = vpack.c.b16 %v945, %v944
    %v971 = vpack.c.b16 %v947, %v946
    %v972 = vpack.c.b16 %v949, %v948
    %v973 = vpack.c.b16 %v951, %v950
    %v974 = vpack.c.b16 %v953, %v952
    %v975 = vpack.c.b16 %v955, %v954
    %v976 = vpack.c.b16 %v957, %v956
    %v977 = vpack.c.b16 %v959, %v958
    %v978 = vpack.c.b16 %v961, %v960
    %v979 = vpack.c.b16 %v963, %v962
    %996 = vmatprep.subr.bf16.mxu0 0
    %997 = vmatpush1.bf16.msra.mxu0 %v971
    %998 = vmatprep.subr.bf16.mxu0 0
    %999 = vmatpush1.bf16.msra.mxu0 %v970
    %1000 = vmatprep.subr.bf16.mxu0 0
    %1001 = vmatpush1.bf16.msra.mxu0 %v969
    %1002 = vmatprep.subr.bf16.mxu0 0
    %1003 = vmatpush1.bf16.msra.mxu0 %v968
    %1004 = vmatprep.subr.bf16.mxu0 0
    %1005 = vmatpush1.bf16.msra.mxu0 %v967
    %1006 = vmatprep.subr.bf16.mxu0 0
    %1007 = vmatpush1.bf16.msra.mxu0 %v966
    %1008 = vmatprep.subr.bf16.mxu0 0
    %1009 = vmatpush1.bf16.msra.mxu0 %v965
    %1010 = vmatprep.subr.bf16.mxu0 0
    %1011 = vmatpush1.bf16.msra.mxu0 %v964
    %1012 = vmatprep.subr.bf16.mxu0 0
    %1013 = vmatpush2.bf16.msra.mxu0 %v979
    %1014 = vmatprep.subr.bf16.mxu0 0
    %1015 = vmatpush2.bf16.msra.mxu0 %v978
    %1016 = vmatprep.subr.bf16.mxu0 0
    %1017 = vmatpush2.bf16.msra.mxu0 %v977
    %1018 = vmatprep.subr.bf16.mxu0 0
    %1019 = vmatpush2.bf16.msra.mxu0 %v976
    %1020 = vmatprep.subr.bf16.mxu0 0
    %1021 = vmatpush2.bf16.msra.mxu0 %v975
    %1022 = vmatprep.subr.bf16.mxu0 0
    %1023 = vmatpush2.bf16.msra.mxu0 %v974
    %1024 = vmatprep.subr.bf16.mxu0 0
    %1025 = vmatpush2.bf16.msra.mxu0 %v973
    %1026 = vmatprep.subr.bf16.mxu0 0
    %1027 = vmatpush2.bf16.msra.mxu0 %v972
    %1028 = vmatprep.mubr.bf16.mxu0 %v860
    %1029 = vmatmul.mubr.bf16.gmra.mxu0 %v859
    %v1030 = vpop.f32.mrf.mxu0
    %v1031 = vadd.f32 %v898, %v1030
    %v1032 = vpop.f32.mrf.mxu0
    %v1033 = vpop.f32.mrf.mxu0
    %v1034 = vpop.f32.mrf.mxu0
    %1035 = vdwg.mxu0
    %1036 = vmax.xlane.f32.xlu0 %v1031
    %v1037 = vpop.xlane.xlu0 %1036
    %v1038 = vsub.f32 %v1031, %v1037
    %v1039 = vmul.f32 %v1038, 1.442695
    %v1040 = vpow.pop %v1039
    %1041 = vadd.xlane.f32.xlu0 %v1040
    %v1042 = vpop.xlane.xlu0 %1041
    %v1043 = vrcp.pop %v1042
    %v1044 = vmul.f32 %v1040, %v1043
    %1045 = vst [vmem:[#allocation7] sm:$0xff] %v338
    %1046 = vst [vmem:[#allocation8] sm:$0xff] %v1044
    %1047 = vst [vmem:[#allocation10] sm:$0xff] %v348
    %1048 = vst [vmem:[#allocation11] sm:$0x3] %v403
    %1049 = vst [vmem:[#allocation11 + $0x2] sm:$0x3] %v404
    %1050 = vst [vmem:[#allocation11 + $0x4] sm:$0x3] %v405
    %1051 = vst [vmem:[#allocation11 + $0x6] sm:$0x3] %v406
    %1052 = vst [vmem:[#allocation11 + $0x8] sm:$0x3] %v407
    %1053 = vst [vmem:[#allocation11 + $0xa] sm:$0x3] %v408
    %1054 = vst [vmem:[#allocation11 + $0xc] sm:$0x3] %v409
    %1055 = vst [vmem:[#allocation11 + $0xe] sm:$0x3] %v410
    // Predicated region
    $region74: #{tpu_custom_call.1} parent=1 // pred_check
      _
    $region75: #{tpu_custom_call.1} parent=1 // pred_check_branch
      %1057 = sbr.rel (0) target = $region77
    $region76: #{tpu_custom_call.1} parent=1 // pred_region
      %s1059 = ssub.s32 128, 128
      %1060 = vsyncadd [#allocation4], %s1059
      %s1062 = sshll.u32 [#allocation7], 4
      %s1063 = int_to_ptr.vmem [resolvable:$true] %s1062
      %1065 = dma.vmem_to_hbm [thread:$0]  %s1063, 128, %s16, [#allocation4]
    $region77: #{tpu_custom_call.1} parent=1 // pred_fallthru
      _
    // Predicated region
    $region78: #{tpu_custom_call.1} parent=1 // pred_check
      _
    $region79: #{tpu_custom_call.1} parent=1 // pred_check_branch
      %1067 = sbr.rel (0) target = $region81
    $region80: #{tpu_custom_call.1} parent=1 // pred_region
      %s1069 = ssub.s32 128, 128
      %1070 = vsyncadd [#allocation9], %s1069
      %s1072 = sshll.u32 [#allocation8], 4
      %s1073 = int_to_ptr.vmem [resolvable:$true] %s1072
      %1075 = dma.vmem_to_hbm [thread:$0]  %s1073, 128, %s17, [#allocation9]
    $region81: #{tpu_custom_call.1} parent=1 // pred_fallthru
      _
    // Predicated region
    $region82: #{tpu_custom_call.1} parent=1 // pred_check
      _
    $region83: #{tpu_custom_call.1} parent=1 // pred_check_branch
      %1077 = sbr.rel (0) target = $region85
    $region84: #{tpu_custom_call.1} parent=1 // pred_region
      %s1079 = ssub.s32 128, 128
      %1080 = vsyncadd [#allocation9], %s1079
      %s1082 = sshll.u32 [#allocation10], 4
      %s1083 = int_to_ptr.vmem [resolvable:$true] %s1082
      %1085 = dma.vmem_to_hbm [thread:$0]  %s1083, 128, %s18, [#allocation9]
    $region85: #{tpu_custom_call.1} parent=1 // pred_fallthru
      _
    // Predicated region
    $region86: #{tpu_custom_call.1} parent=1 // pred_check
      _
    $region87: #{tpu_custom_call.1} parent=1 // pred_check_branch
      %1087 = sbr.rel (0) target = $region89
    $region88: #{tpu_custom_call.1} parent=1 // pred_region
      %s1089 = ssub.s32 256, 256
      %1090 = vsyncadd [#allocation12], %s1089
      %s1091 = sshll.u32 [#allocation11], 4
      %s1092 = int_to_ptr.vmem [resolvable:$true] %s1091
      %1097 = dma.vmem_to_hbm [thread:$0]  %s1092, 256, %s19, [#allocation12], 32, 32, 2
    $region89: #{tpu_custom_call.1} parent=1 // pred_fallthru
      _
    // Predicated region
    $region90: #{tpu_custom_call.1} parent=1 // pred_check
      _
    $region91: #{tpu_custom_call.1} parent=1 // pred_check_branch
      %1099 = sbr.rel (0) target = $region93
    $region92: #{tpu_custom_call.1} parent=1 // pred_region
      %1100 = dma.done [#allocation4], 128
    $region93: #{tpu_custom_call.1} parent=1 // pred_fallthru
      _
    // Predicated region
    $region94: #{tpu_custom_call.1} parent=1 // pred_check
      _
    $region95: #{tpu_custom_call.1} parent=1 // pred_check_branch
      %1102 = sbr.rel (0) target = $region97
    $region96: #{tpu_custom_call.1} parent=1 // pred_region
      %1103 = dma.done [#allocation9], 128
    $region97: #{tpu_custom_call.1} parent=1 // pred_fallthru
      _
    // Predicated region
    $region98: #{tpu_custom_call.1} parent=1 // pred_check
      _
    $region99: #{tpu_custom_call.1} parent=1 // pred_check_branch
      %1105 = sbr.rel (0) target = $region101
    $region100: #{tpu_custom_call.1} parent=1 // pred_region
      %1106 = dma.done [#allocation9], 128
    $region101: #{tpu_custom_call.1} parent=1 // pred_fallthru
      _
    // Predicated region
    $region102: #{tpu_custom_call.1} parent=1 // pred_check
      _
    $region103: #{tpu_custom_call.1} parent=1 // pred_check_branch
      %1108 = sbr.rel (0) target = $region105
    $region104: #{tpu_custom_call.1} parent=1 // pred_region
      %1109 = dma.done [#allocation12], 256
    $region105: #{tpu_custom_call.1} parent=1 // pred_fallthru
      _
    %1110 = vsyncpa [#allocation3], 1
    %1111 = vsyncpa [#allocation6], 1
    %1112 = vsyncpa [#allocation4], 1
    %1113 = vsyncpa [#allocation9], 1
    %1114 = vsyncpa [#allocation12], 1

</llo_original>
